<compile_context>
chip_gen: v7x
topology: tpu7x:2x2x1
jax: 0.10.0
libtpu: 0.0.40
codegen_flags: <defaults>
</compile_context>

<pallas_src>
import functools

import jax
import jax.numpy as jnp
from jax.experimental import pallas as pl
from jax.experimental.pallas import tpu as pltpu


def _round_up(x, m):
    return ((x + m - 1) // m) * m


# --------------------------- fused DGI forward kernel ------------------------
def _dgi_fused_kernel(n_layers, n_nodes, seq_ref, adj_ref, *refs):
    """Both GCN encoders + readout/sigmoid + bilinear discriminator for one
    batch element, entirely on-chip.

    refs = (w_0, b_0, ..., w_{L-1}, b_{L-1}, w_disc, sb, scal, out)
    scal (SMEM, f32[L+1]) = [prelu_alpha_0, ..., prelu_alpha_{L-1}, disc_bias]
    seq_ref block  : (1, 2N, Fin_p)  -- [seq1 ; seq2] row-stacked
    b_k blocks     : (1, 2*Fout_p)   -- bias duplicated for the two halves
    sb block       : (1, 1, 2N)      -- [samp_bias1 | samp_bias2]
    out block      : (1, 1, 2N)      -- [sc_pos | sc_neg]
    """
    layer_refs = refs[: 2 * n_layers]
    wd_ref, sb_ref, scal_ref, out_ref = refs[2 * n_layers:]

    N = n_nodes
    adj = adj_ref[0]            # (N, N) bf16 -- loaded once, reused by every layer
    x = seq_ref[0]              # (2N, Fin_p) bf16 -- clean rows then corrupted rows

    h_rows = None
    for li in range(n_layers):
        w_ref = layer_refs[2 * li]
        b_ref = layer_refs[2 * li + 1]                       # (1, 2*Fout_p) f32
        alpha = scal_ref[li]

        # GCN(x, adj) = PReLU(adj @ (x @ W) + b), both encoders at once.
        fts = jnp.dot(x, w_ref[...], preferred_element_type=jnp.float32)    # (2N, Fout)
        fout = fts.shape[1]
        # wide layout [fts_clean | fts_corrupt] -> single adj matmul for both halves
        fts_wide = jnp.concatenate([fts[:N], fts[N:]], axis=1).astype(adj.dtype)
        h_wide = jnp.dot(adj, fts_wide, preferred_element_type=jnp.float32)  # (N, 2*Fout)
        h_wide = h_wide + b_ref[...]
        h_wide = jnp.where(h_wide > 0.0, h_wide, alpha * h_wide)             # PReLU

        # back to row-stacked (2N, Fout) for the next fc matmul / discriminator
        h_rows = jnp.concatenate([h_wide[:, :fout], h_wide[:, fout:]], axis=0)
        x = h_rows.astype(jnp.bfloat16)

    h1 = h_rows[:N]                                                          # clean embeds, f32
    c = jax.nn.sigmoid(jnp.mean(h1, axis=0, keepdims=True))                  # (1, F)

    # Bilinear discriminator (nn.Bilinear(n_h, n_h, 1)):  sc_i = h_i^T A c + b
    v = jax.lax.dot_general(c, wd_ref[...].astype(jnp.float32),
                            (((1,), (1,)), ((), ())),
                            preferred_element_type=jnp.float32)              # (1, F) = (A c)^T
    sc = jax.lax.dot_general(v, h_rows, (((1,), (1,)), ((), ())),
                             preferred_element_type=jnp.float32)             # (1, 2N)

    b_disc = scal_ref[n_layers]
    out_ref[0] = sc + b_disc + sb_ref[0]                                     # (1, 2N) lane-dense


# ------------------------------- DGI forward ---------------------------------
def dgi_forward(params, seq1, seq2, adj, samp_bias1, samp_bias2, l):
    """DGI.forward: returns logits of shape (B, 2*N) = cat([sc_pos, sc_neg], 1)."""
    B, N, Fin = seq1.shape

    if l == 2:
        layer_keys = [("w1", "b1", "a1"), ("w2", "b2", "a2"), ("w3", "b3", "a3")]
    elif l == 1:
        layer_keys = [("w0", "b0", "a0")]
    else:
        raise ValueError("args.l must be 1 or 2")
    n_layers = len(layer_keys)

    # ---- pad feature dims to multiples of 128, cast matmul operands to bf16
    fin_p = _round_up(Fin, 128)
    ws, bs, alphas = [], [], []
    prev = fin_p
    for wk, bk, ak in layer_keys:
        w, b = params[wk], params[bk]
        fout_p = _round_up(w.shape[1], 128)
        w_p = jnp.zeros((prev, fout_p), jnp.float32).at[: w.shape[0], : w.shape[1]].set(w)
        b_p = jnp.zeros((1, fout_p), jnp.float32).at[0, : b.shape[0]].set(b)
        ws.append(w_p.astype(jnp.bfloat16))
        bs.append(jnp.concatenate([b_p, b_p], axis=1))   # (1, 2*Fout_p) f32, one copy per half
        alphas.append(jnp.asarray(params[ak], jnp.float32))
        prev = fout_p
    f_last_p = prev

    wd = params["w_disc"]
    wd_p = (jnp.zeros((f_last_p, f_last_p), jnp.float32)
            .at[: wd.shape[0], : wd.shape[1]].set(wd).astype(jnp.bfloat16))

    scal = jnp.stack(alphas + [jnp.asarray(params["b_disc"], jnp.float32)])   # (L+1,)

    # row-stack clean & corrupted sequences; concat sample biases along lanes
    seq_all = jnp.concatenate([seq1, seq2], axis=1)                           # (B, 2N, Fin)
    seq_all_p = jnp.pad(seq_all, ((0, 0), (0, 0), (0, fin_p - Fin))).astype(jnp.bfloat16)
    adj_b = adj.astype(jnp.bfloat16)
    sb_all = jnp.concatenate([samp_bias1, samp_bias2], axis=-1)               # (B, 2N)
    sb_all = sb_all.reshape(B, 1, 2 * N).astype(jnp.float32)

    # ---- BlockSpecs: per-batch blocks over grid=(B,); weights resident (constant map)
    in_specs = [
        pl.BlockSpec((1, 2 * N, fin_p), lambda i: (i, 0, 0)),   # stacked sequences
        pl.BlockSpec((1, N, N), lambda i: (i, 0, 0)),           # adj
    ]
    wb_args = []
    for w_p, b_w in zip(ws, bs):
        in_specs.append(pl.BlockSpec(w_p.shape, lambda i: (0, 0)))
        in_specs.append(pl.BlockSpec(b_w.shape, lambda i: (0, 0)))
        wb_args += [w_p, b_w]
    in_specs += [
        pl.BlockSpec(wd_p.shape, lambda i: (0, 0)),             # w_disc
        pl.BlockSpec((1, 1, 2 * N), lambda i: (i, 0, 0)),       # samp biases (stacked)
        pl.BlockSpec(memory_space=pltpu.MemorySpace.SMEM),      # PReLU alphas + disc bias
    ]

    # ---- explicit VMEM budget: double-buffered per-batch blocks + resident weights
    per_step = (2 * N) * fin_p * 2 + N * N * 2 + (2 * N) * 4 + (2 * N) * 4
    resident = sum(w.shape[0] * w.shape[1] * 2 + b.shape[1] * 4 for w, b in zip(ws, bs))
    resident += f_last_p * f_last_p * 2
    vmem_limit = int(min(2 * per_step + resident + (16 << 20), 48 << 20))

    out = pl.pallas_call(
        functools.partial(_dgi_fused_kernel, n_layers, N),
        out_shape=jax.ShapeDtypeStruct((B, 1, 2 * N), jnp.float32),
        grid=(B,),
        in_specs=in_specs,
        out_specs=pl.BlockSpec((1, 1, 2 * N), lambda i: (i, 0, 0)),
        compiler_params=pltpu.CompilerParams(
            dimension_semantics=("parallel",),   # megacore sharding on v7x, neutral elsewhere
            vmem_limit_bytes=vmem_limit,
        ),
    )(seq_all_p, adj_b, *wb_args, wd_p, sb_all, scal)

    # torch.cat((sc_1, sc_2), 1): first N columns = positive, next N = negative
    return out.reshape(B, 2 * N)


def init_params(key, n_in, n_h):
    ks = jax.random.split(key, 6)
    s = 0.1
    return {
        # gcn (used when args.l == 1)
        "w0": s * jax.random.normal(ks[0], (n_in, n_h), jnp.float32),
        "b0": jnp.zeros((n_h,), jnp.float32),
        "a0": jnp.float32(0.25),                      # learnable PReLU slope
        # gcn1 / gcn2 / gcn3 (used when args.l == 2)
        "w1": s * jax.random.normal(ks[1], (n_in, n_h + 200), jnp.float32),
        "b1": jnp.zeros((n_h + 200,), jnp.float32),
        "a1": jnp.float32(0.25),
        "w2": s * jax.random.normal(ks[2], (n_h + 200, n_h + 100), jnp.float32),
        "b2": jnp.zeros((n_h + 100,), jnp.float32),
        "a2": jnp.float32(0.25),
        "w3": s * jax.random.normal(ks[3], (n_h + 100, n_h), jnp.float32),
        "b3": jnp.zeros((n_h,), jnp.float32),
        "a3": jnp.float32(0.25),
        # Discriminator_DGI: nn.Bilinear(n_h, n_h, 1) -> A: (n_h, n_h), bias scalar
        "w_disc": s * jax.random.normal(ks[4], (n_h, n_h), jnp.float32),
        "b_disc": jnp.float32(0.0),
    }


if __name__ == "__main__":
    key = jax.random.PRNGKey(0)
    B, N, n_in, n_h = 2, 8, 16, 32
    args_l = 2   # use the 3-layer encoder path (gcn1 -> gcn2 -> gcn3)

    k1, k2, k3, k4 = jax.random.split(key, 4)
    params = init_params(k1, n_in, n_h)

    seq1 = jax.random.normal(k2, (B, N, n_in), jnp.float32)
    seq2 = jax.random.normal(k3, (B, N, n_in), jnp.float32)   # corrupted features

    # row-normalized dense adjacency (with self loops)
    a = jnp.abs(jax.random.normal(k4, (B, N, N), jnp.float32)) + jnp.eye(N)[None]
    adj = a / jnp.sum(a, axis=-1, keepdims=True)

    samp_bias1 = jnp.zeros((B, N), jnp.float32)
    samp_bias2 = jnp.zeros((B, N), jnp.float32)

    ret = dgi_forward(params, seq1, seq2, adj, samp_bias1, samp_bias2, l=args_l)
    jax.block_until_ready(ret)
    assert ret.shape == (B, 2 * N) and ret.dtype == jnp.float32
    print("KERNEL_OK")
</pallas_src>

<mosaic_0001>
module attributes {stable_mosaic.version = 11 : i64} {
  func.func @_dgi_fused_kernel(%arg0: i32, %arg1: memref<1x16x128xbf16, #tpu.memory_space<vmem>>, %arg2: memref<1x8x8xbf16, #tpu.memory_space<vmem>>, %arg3: memref<128x256xbf16, #tpu.memory_space<vmem>>, %arg4: memref<1x512xf32, #tpu.memory_space<vmem>>, %arg5: memref<256x256xbf16, #tpu.memory_space<vmem>>, %arg6: memref<1x512xf32, #tpu.memory_space<vmem>>, %arg7: memref<256x128xbf16, #tpu.memory_space<vmem>>, %arg8: memref<1x256xf32, #tpu.memory_space<vmem>>, %arg9: memref<128x128xbf16, #tpu.memory_space<vmem>>, %arg10: memref<1x1x16xf32, #tpu.memory_space<vmem>>, %arg11: memref<4xf32, #tpu.memory_space<smem>>, %arg12: memref<1x1x16xf32, #tpu.memory_space<vmem>>) attributes {dimension_semantics = [#tpu.dimension_semantics<parallel>], iteration_bounds = array<i64: 2>, scalar_prefetch = 0 : i64, scratch_operands = 0 : i64, tpu.core_type = #tpu.core_type<tc>, window_params = [{transform_indices = @transform_0, window_bounds = array<i64: 1, 16, 128>}, {transform_indices = @transform_1, window_bounds = array<i64: 1, 8, 8>}, {pipeline_mode = #tpu.pipeline_mode<synchronous>, transform_indices = @transform_2, window_bounds = array<i64: 128, 256>}, {pipeline_mode = #tpu.pipeline_mode<synchronous>, transform_indices = @transform_3, window_bounds = array<i64: 1, 512>}, {pipeline_mode = #tpu.pipeline_mode<synchronous>, transform_indices = @transform_4, window_bounds = array<i64: 256, 256>}, {pipeline_mode = #tpu.pipeline_mode<synchronous>, transform_indices = @transform_5, window_bounds = array<i64: 1, 512>}, {pipeline_mode = #tpu.pipeline_mode<synchronous>, transform_indices = @transform_6, window_bounds = array<i64: 256, 128>}, {pipeline_mode = #tpu.pipeline_mode<synchronous>, transform_indices = @transform_7, window_bounds = array<i64: 1, 256>}, {pipeline_mode = #tpu.pipeline_mode<synchronous>, transform_indices = @transform_8, window_bounds = array<i64: 128, 128>}, {transform_indices = @transform_9, window_bounds = array<i64: 1, 1, 16>}, {transform_indices = @transform_10, window_bounds = array<i64: 4>}, {transform_indices = @transform_11, window_bounds = array<i64: 1, 1, 16>}]} {
    %c0 = arith.constant 0 : index
    %c0_0 = arith.constant 0 : index
    %c0_1 = arith.constant 0 : index
    %0 = vector.load %arg2[%c0, %c0_0, %c0_1] : memref<1x8x8xbf16, #tpu.memory_space<vmem>>, vector<1x8x8xbf16>
    %1 = vector.shape_cast %0 : vector<1x8x8xbf16> to vector<8x8xbf16>
    %c0_2 = arith.constant 0 : index
    %c0_3 = arith.constant 0 : index
    %c0_4 = arith.constant 0 : index
    %2 = vector.load %arg1[%c0_2, %c0_3, %c0_4] : memref<1x16x128xbf16, #tpu.memory_space<vmem>>, vector<1x16x128xbf16>
    %3 = vector.shape_cast %2 : vector<1x16x128xbf16> to vector<16x128xbf16>
    %c0_5 = arith.constant 0 : index
    %4 = memref.load %arg11[%c0_5] : memref<4xf32, #tpu.memory_space<smem>>
    %c0_6 = arith.constant 0 : index
    %c0_7 = arith.constant 0 : index
    %5 = vector.load %arg3[%c0_6, %c0_7] : memref<128x256xbf16, #tpu.memory_space<vmem>>, vector<128x256xbf16>
    %cst = arith.constant dense<0.000000e+00> : vector<16x256xf32>
    %6 = tpu.matmul %3, %5, %cst {dimension_numbers = #tpu.dot_dimension_numbers<[1], [0], [0], [1], [0, 0, 1, 1], [], []>} : vector<16x128xbf16>, vector<128x256xbf16>, vector<16x256xf32> -> vector<16x256xf32>
    %7 = vector.extract_strided_slice %6 {offsets = [0, 0], sizes = [8, 256], strides = [1, 1]} : vector<16x256xf32> to vector<8x256xf32>
    %8 = vector.extract_strided_slice %6 {offsets = [8, 0], sizes = [8, 256], strides = [1, 1]} : vector<16x256xf32> to vector<8x256xf32>
    %9 = tpu.concatenate %7, %8 in 1 : vector<8x256xf32>, vector<8x256xf32> -> vector<8x512xf32>
    %10 = arith.truncf %9 : vector<8x512xf32> to vector<8x512xbf16>
    %cst_8 = arith.constant dense<0.000000e+00> : vector<8x512xf32>
    %11 = tpu.matmul %1, %10, %cst_8 {dimension_numbers = #tpu.dot_dimension_numbers<[1], [0], [0], [1], [0, 0, 1, 1], [], []>} : vector<8x8xbf16>, vector<8x512xbf16>, vector<8x512xf32> -> vector<8x512xf32>
    %c0_9 = arith.constant 0 : index
    %c0_10 = arith.constant 0 : index
    %12 = vector.load %arg4[%c0_9, %c0_10] : memref<1x512xf32, #tpu.memory_space<vmem>>, vector<1x512xf32>
    %13 = vector.broadcast %12 : vector<1x512xf32> to vector<8x512xf32>
    %14 = arith.addf %11, %13 : vector<8x512xf32>
    %cst_11 = arith.constant 0.000000e+00 : f32
    %15 = vector.broadcast %cst_11 : f32 to vector<8x512xf32>
    %16 = arith.cmpf ogt, %14, %15 : vector<8x512xf32>
    %17 = vector.broadcast %4 : f32 to vector<8x512xf32>
    %18 = arith.mulf %17, %14 : vector<8x512xf32>
    %19 = arith.select %16, %14, %18 : vector<8x512xi1>, vector<8x512xf32>
    %20 = vector.extract_strided_slice %19 {offsets = [0, 0], sizes = [8, 256], strides = [1, 1]} : vector<8x512xf32> to vector<8x256xf32>
    %21 = vector.extract_strided_slice %19 {offsets = [0, 256], sizes = [8, 256], strides = [1, 1]} : vector<8x512xf32> to vector<8x256xf32>
    %22 = tpu.concatenate %20, %21 in 0 : vector<8x256xf32>, vector<8x256xf32> -> vector<16x256xf32>
    %23 = arith.truncf %22 : vector<16x256xf32> to vector<16x256xbf16>
    %c1 = arith.constant 1 : index
    %24 = memref.load %arg11[%c1] : memref<4xf32, #tpu.memory_space<smem>>
    %c0_12 = arith.constant 0 : index
    %c0_13 = arith.constant 0 : index
    %25 = vector.load %arg5[%c0_12, %c0_13] : memref<256x256xbf16, #tpu.memory_space<vmem>>, vector<256x256xbf16>
    %cst_14 = arith.constant dense<0.000000e+00> : vector<16x256xf32>
    %26 = tpu.matmul %23, %25, %cst_14 {dimension_numbers = #tpu.dot_dimension_numbers<[1], [0], [0], [1], [0, 0, 1, 1], [], []>} : vector<16x256xbf16>, vector<256x256xbf16>, vector<16x256xf32> -> vector<16x256xf32>
    %27 = vector.extract_strided_slice %26 {offsets = [0, 0], sizes = [8, 256], strides = [1, 1]} : vector<16x256xf32> to vector<8x256xf32>
    %28 = vector.extract_strided_slice %26 {offsets = [8, 0], sizes = [8, 256], strides = [1, 1]} : vector<16x256xf32> to vector<8x256xf32>
    %29 = tpu.concatenate %27, %28 in 1 : vector<8x256xf32>, vector<8x256xf32> -> vector<8x512xf32>
    %30 = arith.truncf %29 : vector<8x512xf32> to vector<8x512xbf16>
    %cst_15 = arith.constant dense<0.000000e+00> : vector<8x512xf32>
    %31 = tpu.matmul %1, %30, %cst_15 {dimension_numbers = #tpu.dot_dimension_numbers<[1], [0], [0], [1], [0, 0, 1, 1], [], []>} : vector<8x8xbf16>, vector<8x512xbf16>, vector<8x512xf32> -> vector<8x512xf32>
    %c0_16 = arith.constant 0 : index
    %c0_17 = arith.constant 0 : index
    %32 = vector.load %arg6[%c0_16, %c0_17] : memref<1x512xf32, #tpu.memory_space<vmem>>, vector<1x512xf32>
    %33 = vector.broadcast %32 : vector<1x512xf32> to vector<8x512xf32>
    %34 = arith.addf %31, %33 : vector<8x512xf32>
    %cst_18 = arith.constant 0.000000e+00 : f32
    %35 = vector.broadcast %cst_18 : f32 to vector<8x512xf32>
    %36 = arith.cmpf ogt, %34, %35 : vector<8x512xf32>
    %37 = vector.broadcast %24 : f32 to vector<8x512xf32>
    %38 = arith.mulf %37, %34 : vector<8x512xf32>
    %39 = arith.select %36, %34, %38 : vector<8x512xi1>, vector<8x512xf32>
    %40 = vector.extract_strided_slice %39 {offsets = [0, 0], sizes = [8, 256], strides = [1, 1]} : vector<8x512xf32> to vector<8x256xf32>
    %41 = vector.extract_strided_slice %39 {offsets = [0, 256], sizes = [8, 256], strides = [1, 1]} : vector<8x512xf32> to vector<8x256xf32>
    %42 = tpu.concatenate %40, %41 in 0 : vector<8x256xf32>, vector<8x256xf32> -> vector<16x256xf32>
    %43 = arith.truncf %42 : vector<16x256xf32> to vector<16x256xbf16>
    %c2 = arith.constant 2 : index
    %44 = memref.load %arg11[%c2] : memref<4xf32, #tpu.memory_space<smem>>
    %c0_19 = arith.constant 0 : index
    %c0_20 = arith.constant 0 : index
    %45 = vector.load %arg7[%c0_19, %c0_20] : memref<256x128xbf16, #tpu.memory_space<vmem>>, vector<256x128xbf16>
    %cst_21 = arith.constant dense<0.000000e+00> : vector<16x128xf32>
    %46 = tpu.matmul %43, %45, %cst_21 {dimension_numbers = #tpu.dot_dimension_numbers<[1], [0], [0], [1], [0, 0, 1, 1], [], []>} : vector<16x256xbf16>, vector<256x128xbf16>, vector<16x128xf32> -> vector<16x128xf32>
    %47 = vector.extract_strided_slice %46 {offsets = [0, 0], sizes = [8, 128], strides = [1, 1]} : vector<16x128xf32> to vector<8x128xf32>
    %48 = vector.extract_strided_slice %46 {offsets = [8, 0], sizes = [8, 128], strides = [1, 1]} : vector<16x128xf32> to vector<8x128xf32>
    %49 = tpu.concatenate %47, %48 in 1 : vector<8x128xf32>, vector<8x128xf32> -> vector<8x256xf32>
    %50 = arith.truncf %49 : vector<8x256xf32> to vector<8x256xbf16>
    %cst_22 = arith.constant dense<0.000000e+00> : vector<8x256xf32>
    %51 = tpu.matmul %1, %50, %cst_22 {dimension_numbers = #tpu.dot_dimension_numbers<[1], [0], [0], [1], [0, 0, 1, 1], [], []>} : vector<8x8xbf16>, vector<8x256xbf16>, vector<8x256xf32> -> vector<8x256xf32>
    %c0_23 = arith.constant 0 : index
    %c0_24 = arith.constant 0 : index
    %52 = vector.load %arg8[%c0_23, %c0_24] : memref<1x256xf32, #tpu.memory_space<vmem>>, vector<1x256xf32>
    %53 = vector.broadcast %52 : vector<1x256xf32> to vector<8x256xf32>
    %54 = arith.addf %51, %53 : vector<8x256xf32>
    %cst_25 = arith.constant 0.000000e+00 : f32
    %55 = vector.broadcast %cst_25 : f32 to vector<8x256xf32>
    %56 = arith.cmpf ogt, %54, %55 : vector<8x256xf32>
    %57 = vector.broadcast %44 : f32 to vector<8x256xf32>
    %58 = arith.mulf %57, %54 : vector<8x256xf32>
    %59 = arith.select %56, %54, %58 : vector<8x256xi1>, vector<8x256xf32>
    %60 = vector.extract_strided_slice %59 {offsets = [0, 0], sizes = [8, 128], strides = [1, 1]} : vector<8x256xf32> to vector<8x128xf32>
    %61 = vector.extract_strided_slice %59 {offsets = [0, 128], sizes = [8, 128], strides = [1, 1]} : vector<8x256xf32> to vector<8x128xf32>
    %62 = tpu.concatenate %60, %61 in 0 : vector<8x128xf32>, vector<8x128xf32> -> vector<16x128xf32>
    %63 = vector.extract_strided_slice %62 {offsets = [0, 0], sizes = [8, 128], strides = [1, 1]} : vector<16x128xf32> to vector<8x128xf32>
    %cst_26 = arith.constant dense<0.000000e+00> : vector<128xf32>
    %64 = vector.multi_reduction <add>, %63, %cst_26 [0] : vector<8x128xf32> to vector<128xf32>
    %65 = vector.shape_cast %64 : vector<128xf32> to vector<1x128xf32>
    %cst_27 = arith.constant 8.000000e+00 : f32
    %66 = vector.broadcast %cst_27 : f32 to vector<1x128xf32>
    %67 = arith.divf %65, %66 : vector<1x128xf32>
    %68 = arith.negf %67 : vector<1x128xf32>
    %69 = math.exp %68 : vector<1x128xf32>
    %cst_28 = arith.constant 1.000000e+00 : f32
    %70 = vector.broadcast %cst_28 : f32 to vector<1x128xf32>
    %71 = arith.addf %70, %69 : vector<1x128xf32>
    %72 = arith.divf %70, %71 : vector<1x128xf32>
    %c0_29 = arith.constant 0 : index
    %c0_30 = arith.constant 0 : index
    %73 = vector.load %arg9[%c0_29, %c0_30] : memref<128x128xbf16, #tpu.memory_space<vmem>>, vector<128x128xbf16>
    %74 = arith.extf %73 : vector<128x128xbf16> to vector<128x128xf32>
    %cst_31 = arith.constant dense<0.000000e+00> : vector<1x128xf32>
    %75 = tpu.matmul %72, %74, %cst_31 {dimension_numbers = #tpu.dot_dimension_numbers<[1], [1], [0], [0], [0, 0, 1, 0], [], []>} : vector<1x128xf32>, vector<128x128xf32>, vector<1x128xf32> -> vector<1x128xf32>
    %cst_32 = arith.constant dense<0.000000e+00> : vector<1x16xf32>
    %76 = tpu.matmul %75, %62, %cst_32 {dimension_numbers = #tpu.dot_dimension_numbers<[1], [1], [0], [0], [0, 0, 1, 0], [], []>} : vector<1x128xf32>, vector<16x128xf32>, vector<1x16xf32> -> vector<1x16xf32>
    %c3 = arith.constant 3 : index
    %77 = memref.load %arg11[%c3] : memref<4xf32, #tpu.memory_space<smem>>
    %78 = vector.broadcast %77 : f32 to vector<1x16xf32>
    %79 = arith.addf %76, %78 : vector<1x16xf32>
    %c0_33 = arith.constant 0 : index
    %c0_34 = arith.constant 0 : index
    %c0_35 = arith.constant 0 : index
    %80 = vector.load %arg10[%c0_33, %c0_34, %c0_35] : memref<1x1x16xf32, #tpu.memory_space<vmem>>, vector<1x1x16xf32>
    %81 = vector.shape_cast %80 : vector<1x1x16xf32> to vector<1x16xf32>
    %82 = arith.addf %79, %81 : vector<1x16xf32>
    %c0_36 = arith.constant 0 : index
    %c0_37 = arith.constant 0 : index
    %c0_38 = arith.constant 0 : index
    %83 = vector.load %arg12[%c0_36, %c0_37, %c0_38] : memref<1x1x16xf32, #tpu.memory_space<vmem>>, vector<1x1x16xf32>
    %84 = vector.shape_cast %83 : vector<1x1x16xf32> to vector<1x16xf32>
    %85 = vector.shape_cast %82 : vector<1x16xf32> to vector<1x1x16xf32>
    tpu.vector_store %arg12[%c0_36, %c0_37, %c0_38], %85 {strides = array<i32>} : memref<1x1x16xf32, #tpu.memory_space<vmem>>, vector<1x1x16xf32>,
    return
  }
  func.func @transform_0(%arg0: i32) -> (i32, i32, i32) {
    %c0_i32 = arith.constant 0 : i32
    %c0_i32_0 = arith.constant 0 : i32
    %c0_i32_1 = arith.constant 0 : i32
    return %arg0, %c0_i32, %c0_i32_0 : i32, i32, i32
  }
  func.func @transform_1(%arg0: i32) -> (i32, i32, i32) {
    %c0_i32 = arith.constant 0 : i32
    %c0_i32_0 = arith.constant 0 : i32
    %c0_i32_1 = arith.constant 0 : i32
    return %arg0, %c0_i32, %c0_i32_0 : i32, i32, i32
  }
  func.func @transform_2(%arg0: i32) -> (i32, i32) {
    %c0_i32 = arith.constant 0 : i32
    %c0_i32_0 = arith.constant 0 : i32
    %c0_i32_1 = arith.constant 0 : i32
    return %c0_i32, %c0_i32_0 : i32, i32
  }
  func.func @transform_3(%arg0: i32) -> (i32, i32) {
    %c0_i32 = arith.constant 0 : i32
    %c0_i32_0 = arith.constant 0 : i32
    %c0_i32_1 = arith.constant 0 : i32
    return %c0_i32, %c0_i32_0 : i32, i32
  }
  func.func @transform_4(%arg0: i32) -> (i32, i32) {
    %c0_i32 = arith.constant 0 : i32
    %c0_i32_0 = arith.constant 0 : i32
    %c0_i32_1 = arith.constant 0 : i32
    return %c0_i32, %c0_i32_0 : i32, i32
  }
  func.func @transform_5(%arg0: i32) -> (i32, i32) {
    %c0_i32 = arith.constant 0 : i32
    %c0_i32_0 = arith.constant 0 : i32
    %c0_i32_1 = arith.constant 0 : i32
    return %c0_i32, %c0_i32_0 : i32, i32
  }
  func.func @transform_6(%arg0: i32) -> (i32, i32) {
    %c0_i32 = arith.constant 0 : i32
    %c0_i32_0 = arith.constant 0 : i32
    %c0_i32_1 = arith.constant 0 : i32
    return %c0_i32, %c0_i32_0 : i32, i32
  }
  func.func @transform_7(%arg0: i32) -> (i32, i32) {
    %c0_i32 = arith.constant 0 : i32
    %c0_i32_0 = arith.constant 0 : i32
    %c0_i32_1 = arith.constant 0 : i32
    return %c0_i32, %c0_i32_0 : i32, i32
  }
  func.func @transform_8(%arg0: i32) -> (i32, i32) {
    %c0_i32 = arith.constant 0 : i32
    %c0_i32_0 = arith.constant 0 : i32
    %c0_i32_1 = arith.constant 0 : i32
    return %c0_i32, %c0_i32_0 : i32, i32
  }
  func.func @transform_9(%arg0: i32) -> (i32, i32, i32) {
    %c0_i32 = arith.constant 0 : i32
    %c0_i32_0 = arith.constant 0 : i32
    %c0_i32_1 = arith.constant 0 : i32
    return %arg0, %c0_i32, %c0_i32_0 : i32, i32, i32
  }
  func.func @transform_10(%arg0: i32) -> i32 {
    %c0_i32 = arith.constant 0 : i32
    %c0_i32_0 = arith.constant 0 : i32
    return %c0_i32 : i32
  }
  func.func @transform_11(%arg0: i32) -> (i32, i32, i32) {
    %c0_i32 = arith.constant 0 : i32
    %c0_i32_0 = arith.constant 0 : i32
    %c0_i32_1 = arith.constant 0 : i32
    return %arg0, %c0_i32, %c0_i32_0 : i32, i32, i32
  }
}

</mosaic_0001>

<llo_original>
// kernel: tpu_custom_call.1
$region0: #{tpu_custom_call.1}
  #allocation0 [shape = 'u32[]', space=smem, size = 0x4, offset = 0x4, fixed_abs, tag = 'smem constant byte address 0x4 - core index']
  #allocation1 [shape = 'u32[144,128]{1,0:T(1,128)}', space=vmem, size = 0x12000, scoped, tag = 'internal scratch']
  %s0 = inlined_call_operand.hbm [shape: bf16[2,16,128], index: 0, kind: input, shape index: {}]
  %s1 = inlined_call_operand.hbm [shape: bf16[2,8,8], index: 1, kind: input, shape index: {}]
  %s2 = inlined_call_operand.hbm [shape: bf16[128,256], index: 2, kind: input, shape index: {}]
  %s3 = inlined_call_operand.vmem [shape: f32[1,512], index: 3, kind: input, shape index: {}]
  %s4 = inlined_call_operand.hbm [shape: bf16[256,256], index: 4, kind: input, shape index: {}]
  %s5 = inlined_call_operand.vmem [shape: f32[1,512], index: 5, kind: input, shape index: {}]
  %s6 = inlined_call_operand.hbm [shape: bf16[256,128], index: 6, kind: input, shape index: {}]
  %s7 = inlined_call_operand.vmem [shape: f32[1,256], index: 7, kind: input, shape index: {}]
  %s8 = inlined_call_operand.hbm [shape: bf16[128,128], index: 8, kind: input, shape index: {}]
  %s9 = inlined_call_operand.vmem [shape: f32[2,1,16], index: 9, kind: input, shape index: {}]
  %s10 = inlined_call_operand.vmem [shape: f32[4], index: 10, kind: input, shape index: {}]
  %s11 = inlined_call_operand.hbm [shape: f32[2,1,16], index: 11, kind: output, shape index: {}]
  %s12 = sld [smem:[#allocation0]]
  $region105: #{tpu_custom_call.1} parent=0
    _
  %s14 = ssub.s32 1, %s12
  %s15 = scalar_select 0, %s14, %s12
  $region1: #{tpu_custom_call.1} parent=0
    #allocation2 [shape = 'u8[8192]{0}', space=vmem, size = 0x2000, scoped, tag = 'input window, operand 0']
    #allocation3 [shape = 's32[2]{0}', space=sflag, size = 0x8, scoped, tag = 'scoped memory for tpu_custom_call.1']
    #allocation4 [shape = 's32[2]{0}', space=sflag, size = 0x8, scoped, tag = 'scoped memory for tpu_custom_call.1']
    #allocation5 [shape = 's32[2]{0}', space=sflag, size = 0x8, scoped, tag = 'scoped memory for tpu_custom_call.1']
    #allocation6 [shape = 'u8[4096]{0}', space=vmem, size = 0x1000, scoped, tag = 'input window, operand 1']
    #allocation7 [shape = 's32[2]{0}', space=sflag, size = 0x8, scoped, tag = 'scoped memory for tpu_custom_call.1']
    #allocation8 [shape = 'u8[65536]{0}', space=vmem, size = 0x10000, scoped, tag = 'input window, operand 2, single buffered']
    #allocation9 [shape = 'u8[131072]{0}', space=vmem, size = 0x20000, scoped, tag = 'input window, operand 4, single buffered']
    #allocation10 [shape = 's32[1]{0}', space=sflag, size = 0x4, scoped, tag = 'scoped memory for tpu_custom_call.1']
    #allocation11 [shape = 'u8[65536]{0}', space=vmem, size = 0x10000, scoped, tag = 'input window, operand 6, single buffered']
    #allocation12 [shape = 'u8[32768]{0}', space=vmem, size = 0x8000, scoped, tag = 'input window, operand 8, single buffered']
    #allocation13 [shape = 's32[1]{0}', space=sflag, size = 0x4, scoped, tag = 'scoped memory for tpu_custom_call.1']
    #allocation14 [shape = 'u8[512]{0}', space=smem, size = 0x200, scoped, tag = 'input window, operand 10, single buffered']
    #allocation15 [shape = 'u8[1024]{0}', space=vmem, size = 0x400, scoped, tag = 'output window, operand 0']
    %16 = vsyncpa [#allocation3], 0
    %s17 = scalar_lea.sflag [#allocation3], 1
    %18 = vsyncpa %s17, 0
    %19 = vsyncpa [#allocation7], 0
    %s20 = scalar_lea.sflag [#allocation7], 1
    %21 = vsyncpa %s20, 0
    %22 = vsyncpa [#allocation10], 0
    %23 = vsyncpa [#allocation13], 0
    %24 = vsyncpa [#allocation5], 0
    %25 = vsyncpa [#allocation4], 0
    %s26 = scalar_lea.sflag [#allocation4], 1
    %27 = vsyncpa %s26, 0
    loop: start=0, step=1, limit=4
    $region2: #{tpu_custom_call.1} parent=1 // loop_pre_header
      _
    $region3: #{tpu_custom_call.1} parent=1 // loop_header
      %s29 = sphi 0, %s33
      %p30 = scmp.ge.s32.totalorder %s29, 4
      %s39 = sphi 0, %s41
      %s42 = sphi 0, %s39
      %s43 = sphi 0, %s42
      %s59 = sphi 0, %s43
      %s65 = sphi 0, %s67
      %s68 = sphi 0, %s65
      %s69 = sphi 0, %s68
      %s85 = sphi 0, %s69
      %s89 = sphi 0, %s89
      %s91 = sphi 0, %s89
      %s92 = sphi 0, %s91
      %s106 = sphi 0, %s92
      %s110 = sphi 0, %s110
      %s112 = sphi 0, %s110
      %s113 = sphi 0, %s112
      %s127 = sphi 0, %s113
      %s131 = sphi 0, %s131
      %s133 = sphi 0, %s131
      %s134 = sphi 0, %s133
      %s148 = sphi 0, %s134
      %s152 = sphi 0, %s152
      %s154 = sphi 0, %s152
      %s155 = sphi 0, %s154
      %s169 = sphi 0, %s155
      %s173 = sphi 0, %s173
      %s175 = sphi 0, %s173
      %s176 = sphi 0, %s175
      %s190 = sphi 0, %s176
      %s194 = sphi 0, %s194
      %s196 = sphi 0, %s194
      %s197 = sphi 0, %s196
      %s211 = sphi 0, %s197
      %s215 = sphi 0, %s215
      %s217 = sphi 0, %s215
      %s218 = sphi 0, %s217
      %s232 = sphi 0, %s218
      %s238 = sphi 0, %s240
      %s241 = sphi 0, %s238
      %s242 = sphi 0, %s241
      %s258 = sphi 0, %s242
      %s262 = sphi 0, %s262
      %s264 = sphi 0, %s262
      %s265 = sphi 0, %s264
      %s279 = sphi 0, %s265
      %s285 = sphi 0, %s287
      %s288 = sphi 0, %s285
      %s289 = sphi 0, %s288
      %s305 = sphi 0, %s289
    $region4: #{tpu_custom_call.1} parent=1 // loop_header_branch
      %32 = sbr.rel (%p30) target = $region8
    $region5: #{tpu_custom_call.1} parent=1 // loop_body
      %s34 = ssub.s32 %s29, 1
      %s35 = ssub.s32 %s29, 2
      %s36 = sadd.s32 %s29, 1
      %s37 = ssub.s32 %s29, %s36
      %p38 = scmp.eq.s32.totalorder %s37, 0
      %s40 = sadd.s32 %s39, 1
      %s41 = scalar_select %p38, %s39, %s40
      %p44 = pneg %p38
      %p45 = scmp.eq.s32.totalorder %s29, 1
      %p46 = por %p44, %p45
      %p47 = scmp.ne.s32.totalorder %s39, %s42
      %p48 = scmp.eq.s32.totalorder %s29, 0
      %p49 = por %p47, %p48
      %p50 = scmp.ne.s32.totalorder %s39, %s42
      %p51 = scmp.eq.s32.totalorder %s34, 1
      %p52 = por %p50, %p51
      %p53 = scmp.ne.s32.totalorder %s42, %s43
      %p54 = scmp.eq.s32.totalorder %s34, 0
      %p55 = por %p53, %p54
      %p56 = scmp.ne.s32.totalorder %s42, %s43
      %p57 = scmp.eq.s32.totalorder %s35, 1
      %p58 = por %p56, %p57
      %p60 = scmp.ne.s32.totalorder %s43, %s59
      %p61 = scmp.eq.s32.totalorder %s35, 0
      %p62 = por %p60, %p61
      %s63 = ssub.s32 %s29, %s36
      %p64 = scmp.eq.s32.totalorder %s63, 0
      %s66 = sadd.s32 %s65, 1
      %s67 = scalar_select %p64, %s65, %s66
      %p70 = pneg %p64
      %p71 = scmp.eq.s32.totalorder %s29, 1
      %p72 = por %p70, %p71
      %p73 = scmp.ne.s32.totalorder %s65, %s68
      %p74 = scmp.eq.s32.totalorder %s29, 0
      %p75 = por %p73, %p74
      %p76 = scmp.ne.s32.totalorder %s65, %s68
      %p77 = scmp.eq.s32.totalorder %s34, 1
      %p78 = por %p76, %p77
      %p79 = scmp.ne.s32.totalorder %s68, %s69
      %p80 = scmp.eq.s32.totalorder %s34, 0
      %p81 = por %p79, %p80
      %p82 = scmp.ne.s32.totalorder %s68, %s69
      %p83 = scmp.eq.s32.totalorder %s35, 1
      %p84 = por %p82, %p83
      %p86 = scmp.ne.s32.totalorder %s69, %s85
      %p87 = scmp.eq.s32.totalorder %s35, 0
      %p88 = por %p86, %p87
      %s90 = sadd.s32 %s89, 1
      %p93 = scmp.eq.s32.totalorder %s29, 1
      %p94 = scmp.ne.s32.totalorder %s89, %s91
      %p95 = scmp.eq.s32.totalorder %s29, 0
      %p96 = por %p94, %p95
      %p97 = scmp.ne.s32.totalorder %s89, %s91
      %p98 = scmp.eq.s32.totalorder %s34, 1
      %p99 = por %p97, %p98
      %p100 = scmp.ne.s32.totalorder %s91, %s92
      %p101 = scmp.eq.s32.totalorder %s34, 0
      %p102 = por %p100, %p101
      %p103 = scmp.ne.s32.totalorder %s91, %s92
      %p104 = scmp.eq.s32.totalorder %s35, 1
      %p105 = por %p103, %p104
      %p107 = scmp.ne.s32.totalorder %s92, %s106
      %p108 = scmp.eq.s32.totalorder %s35, 0
      %p109 = por %p107, %p108
      %s111 = sadd.s32 %s110, 1
      %p114 = scmp.eq.s32.totalorder %s29, 1
      %p115 = scmp.ne.s32.totalorder %s110, %s112
      %p116 = scmp.eq.s32.totalorder %s29, 0
      %p117 = por %p115, %p116
      %p118 = scmp.ne.s32.totalorder %s110, %s112
      %p119 = scmp.eq.s32.totalorder %s34, 1
      %p120 = por %p118, %p119
      %p121 = scmp.ne.s32.totalorder %s112, %s113
      %p122 = scmp.eq.s32.totalorder %s34, 0
      %p123 = por %p121, %p122
      %p124 = scmp.ne.s32.totalorder %s112, %s113
      %p125 = scmp.eq.s32.totalorder %s35, 1
      %p126 = por %p124, %p125
      %p128 = scmp.ne.s32.totalorder %s113, %s127
      %p129 = scmp.eq.s32.totalorder %s35, 0
      %p130 = por %p128, %p129
      %s132 = sadd.s32 %s131, 1
      %p135 = scmp.eq.s32.totalorder %s29, 1
      %p136 = scmp.ne.s32.totalorder %s131, %s133
      %p137 = scmp.eq.s32.totalorder %s29, 0
      %p138 = por %p136, %p137
      %p139 = scmp.ne.s32.totalorder %s131, %s133
      %p140 = scmp.eq.s32.totalorder %s34, 1
      %p141 = por %p139, %p140
      %p142 = scmp.ne.s32.totalorder %s133, %s134
      %p143 = scmp.eq.s32.totalorder %s34, 0
      %p144 = por %p142, %p143
      %p145 = scmp.ne.s32.totalorder %s133, %s134
      %p146 = scmp.eq.s32.totalorder %s35, 1
      %p147 = por %p145, %p146
      %p149 = scmp.ne.s32.totalorder %s134, %s148
      %p150 = scmp.eq.s32.totalorder %s35, 0
      %p151 = por %p149, %p150
      %s153 = sadd.s32 %s152, 1
      %p156 = scmp.eq.s32.totalorder %s29, 1
      %p157 = scmp.ne.s32.totalorder %s152, %s154
      %p158 = scmp.eq.s32.totalorder %s29, 0
      %p159 = por %p157, %p158
      %p160 = scmp.ne.s32.totalorder %s152, %s154
      %p161 = scmp.eq.s32.totalorder %s34, 1
      %p162 = por %p160, %p161
      %p163 = scmp.ne.s32.totalorder %s154, %s155
      %p164 = scmp.eq.s32.totalorder %s34, 0
      %p165 = por %p163, %p164
      %p166 = scmp.ne.s32.totalorder %s154, %s155
      %p167 = scmp.eq.s32.totalorder %s35, 1
      %p168 = por %p166, %p167
      %p170 = scmp.ne.s32.totalorder %s155, %s169
      %p171 = scmp.eq.s32.totalorder %s35, 0
      %p172 = por %p170, %p171
      %s174 = sadd.s32 %s173, 1
      %p177 = scmp.eq.s32.totalorder %s29, 1
      %p178 = scmp.ne.s32.totalorder %s173, %s175
      %p179 = scmp.eq.s32.totalorder %s29, 0
      %p180 = por %p178, %p179
      %p181 = scmp.ne.s32.totalorder %s173, %s175
      %p182 = scmp.eq.s32.totalorder %s34, 1
      %p183 = por %p181, %p182
      %p184 = scmp.ne.s32.totalorder %s175, %s176
      %p185 = scmp.eq.s32.totalorder %s34, 0
      %p186 = por %p184, %p185
      %p187 = scmp.ne.s32.totalorder %s175, %s176
      %p188 = scmp.eq.s32.totalorder %s35, 1
      %p189 = por %p187, %p188
      %p191 = scmp.ne.s32.totalorder %s176, %s190
      %p192 = scmp.eq.s32.totalorder %s35, 0
      %p193 = por %p191, %p192
      %s195 = sadd.s32 %s194, 1
      %p198 = scmp.eq.s32.totalorder %s29, 1
      %p199 = scmp.ne.s32.totalorder %s194, %s196
      %p200 = scmp.eq.s32.totalorder %s29, 0
      %p201 = por %p199, %p200
      %p202 = scmp.ne.s32.totalorder %s194, %s196
      %p203 = scmp.eq.s32.totalorder %s34, 1
      %p204 = por %p202, %p203
      %p205 = scmp.ne.s32.totalorder %s196, %s197
      %p206 = scmp.eq.s32.totalorder %s34, 0
      %p207 = por %p205, %p206
      %p208 = scmp.ne.s32.totalorder %s196, %s197
      %p209 = scmp.eq.s32.totalorder %s35, 1
      %p210 = por %p208, %p209
      %p212 = scmp.ne.s32.totalorder %s197, %s211
      %p213 = scmp.eq.s32.totalorder %s35, 0
      %p214 = por %p212, %p213
      %s216 = sadd.s32 %s215, 1
      %p219 = scmp.eq.s32.totalorder %s29, 1
      %p220 = scmp.ne.s32.totalorder %s215, %s217
      %p221 = scmp.eq.s32.totalorder %s29, 0
      %p222 = por %p220, %p221
      %p223 = scmp.ne.s32.totalorder %s215, %s217
      %p224 = scmp.eq.s32.totalorder %s34, 1
      %p225 = por %p223, %p224
      %p226 = scmp.ne.s32.totalorder %s217, %s218
      %p227 = scmp.eq.s32.totalorder %s34, 0
      %p228 = por %p226, %p227
      %p229 = scmp.ne.s32.totalorder %s217, %s218
      %p230 = scmp.eq.s32.totalorder %s35, 1
      %p231 = por %p229, %p230
      %p233 = scmp.ne.s32.totalorder %s218, %s232
      %p234 = scmp.eq.s32.totalorder %s35, 0
      %p235 = por %p233, %p234
      %s236 = ssub.s32 %s29, %s36
      %p237 = scmp.eq.s32.totalorder %s236, 0
      %s239 = sadd.s32 %s238, 1
      %s240 = scalar_select %p237, %s238, %s239
      %p243 = pneg %p237
      %p244 = scmp.eq.s32.totalorder %s29, 1
      %p245 = por %p243, %p244
      %p246 = scmp.ne.s32.totalorder %s238, %s241
      %p247 = scmp.eq.s32.totalorder %s29, 0
      %p248 = por %p246, %p247
      %p249 = scmp.ne.s32.totalorder %s238, %s241
      %p250 = scmp.eq.s32.totalorder %s34, 1
      %p251 = por %p249, %p250
      %p252 = scmp.ne.s32.totalorder %s241, %s242
      %p253 = scmp.eq.s32.totalorder %s34, 0
      %p254 = por %p252, %p253
      %p255 = scmp.ne.s32.totalorder %s241, %s242
      %p256 = scmp.eq.s32.totalorder %s35, 1
      %p257 = por %p255, %p256
      %p259 = scmp.ne.s32.totalorder %s242, %s258
      %p260 = scmp.eq.s32.totalorder %s35, 0
      %p261 = por %p259, %p260
      %s263 = sadd.s32 %s262, 1
      %p266 = scmp.eq.s32.totalorder %s29, 1
      %p267 = scmp.ne.s32.totalorder %s262, %s264
      %p268 = scmp.eq.s32.totalorder %s29, 0
      %p269 = por %p267, %p268
      %p270 = scmp.ne.s32.totalorder %s262, %s264
      %p271 = scmp.eq.s32.totalorder %s34, 1
      %p272 = por %p270, %p271
      %p273 = scmp.ne.s32.totalorder %s264, %s265
      %p274 = scmp.eq.s32.totalorder %s34, 0
      %p275 = por %p273, %p274
      %p276 = scmp.ne.s32.totalorder %s264, %s265
      %p277 = scmp.eq.s32.totalorder %s35, 1
      %p278 = por %p276, %p277
      %p280 = scmp.ne.s32.totalorder %s265, %s279
      %p281 = scmp.eq.s32.totalorder %s35, 0
      %p282 = por %p280, %p281
      %s283 = ssub.s32 %s29, %s36
      %p284 = scmp.eq.s32.totalorder %s283, 0
      %s286 = sadd.s32 %s285, 1
      %s287 = scalar_select %p284, %s285, %s286
      %p290 = pneg %p284
      %p291 = scmp.eq.s32.totalorder %s29, 1
      %p292 = por %p290, %p291
      %p293 = scmp.ne.s32.totalorder %s285, %s288
      %p294 = scmp.eq.s32.totalorder %s29, 0
      %p295 = por %p293, %p294
      %p296 = scmp.ne.s32.totalorder %s285, %s288
      %p297 = scmp.eq.s32.totalorder %s34, 1
      %p298 = por %p296, %p297
      %p299 = scmp.ne.s32.totalorder %s288, %s289
      %p300 = scmp.eq.s32.totalorder %s34, 0
      %p301 = por %p299, %p300
      %p302 = scmp.ne.s32.totalorder %s288, %s289
      %p303 = scmp.eq.s32.totalorder %s35, 1
      %p304 = por %p302, %p303
      %p306 = scmp.ne.s32.totalorder %s289, %s305
      %p307 = scmp.eq.s32.totalorder %s35, 0
      %p308 = por %p306, %p307
      %p309 = scmp.le.s32.totalorder 1, %s29
      %p310 = scmp.lt.s32.totalorder %s29, 3
      %p311 = pnand %p309, %p310
      %p312 = pneg %p311
      // Predicated region
      $region9: #{tpu_custom_call.1} parent=5 // pred_check
        _
      $region10: #{tpu_custom_call.1} parent=5 // pred_check_branch
        %314 = sbr.rel (%p311) target = $region12
      $region11: #{tpu_custom_call.1} parent=5 // pred_region
        %s315 = ssub.s32 %s29, 1
        // Predicated region
        $region13: #{tpu_custom_call.1} parent=11 // pred_check
          %p316 = pneg %p102
        $region14: #{tpu_custom_call.1} parent=11 // pred_check_branch
          %318 = sbr.rel (%p316) target = $region16
        $region15: #{tpu_custom_call.1} parent=11 // pred_region
          %s320 = ssub.s32 2048, 2048
          %321 = vsyncadd [#allocation7], %s320
          %s322 = sshll.u32 [#allocation8], 4
          %s323 = int_to_ptr.vmem [resolvable:$true] %s322
          %328 = dma.hbm_to_vmem [thread:$0]  %s2, 2048, %s323, [#allocation7], 128, 128, 8
        $region16: #{tpu_custom_call.1} parent=11 // pred_fallthru
          _
        // Predicated region
        $region17: #{tpu_custom_call.1} parent=11 // pred_check
          %p329 = pneg %p123
        $region18: #{tpu_custom_call.1} parent=11 // pred_check_branch
          %331 = sbr.rel (%p329) target = $region20
        $region19: #{tpu_custom_call.1} parent=11 // pred_region
          _
        $region20: #{tpu_custom_call.1} parent=11 // pred_fallthru
          _
        // Predicated region
        $region21: #{tpu_custom_call.1} parent=11 // pred_check
          %p332 = pneg %p144
        $region22: #{tpu_custom_call.1} parent=11 // pred_check_branch
          %334 = sbr.rel (%p332) target = $region24
        $region23: #{tpu_custom_call.1} parent=11 // pred_region
          %s336 = ssub.s32 4096, 4096
          %337 = vsyncadd [#allocation10], %s336
          %s338 = sshll.u32 [#allocation9], 4
          %s339 = int_to_ptr.vmem [resolvable:$true] %s338
          %344 = dma.hbm_to_vmem [thread:$0]  %s4, 4096, %s339, [#allocation10], 128, 128, 8
        $region24: #{tpu_custom_call.1} parent=11 // pred_fallthru
          _
        // Predicated region
        $region25: #{tpu_custom_call.1} parent=11 // pred_check
          %p345 = pneg %p165
        $region26: #{tpu_custom_call.1} parent=11 // pred_check_branch
          %347 = sbr.rel (%p345) target = $region28
        $region27: #{tpu_custom_call.1} parent=11 // pred_region
          _
        $region28: #{tpu_custom_call.1} parent=11 // pred_fallthru
          _
        // Predicated region
        $region29: #{tpu_custom_call.1} parent=11 // pred_check
          %p348 = pneg %p186
        $region30: #{tpu_custom_call.1} parent=11 // pred_check_branch
          %350 = sbr.rel (%p348) target = $region32
        $region31: #{tpu_custom_call.1} parent=11 // pred_region
          %s352 = ssub.s32 2048, 2048
          %353 = vsyncadd [#allocation10], %s352
          %s354 = sshll.u32 [#allocation11], 4
          %s355 = int_to_ptr.vmem [resolvable:$true] %s354
          %360 = dma.hbm_to_vmem [thread:$0]  %s6, 2048, %s355, [#allocation10], 64, 64, 4
        $region32: #{tpu_custom_call.1} parent=11 // pred_fallthru
          _
        // Predicated region
        $region33: #{tpu_custom_call.1} parent=11 // pred_check
          %p361 = pneg %p207
        $region34: #{tpu_custom_call.1} parent=11 // pred_check_branch
          %363 = sbr.rel (%p361) target = $region36
        $region35: #{tpu_custom_call.1} parent=11 // pred_region
          _
        $region36: #{tpu_custom_call.1} parent=11 // pred_fallthru
          _
        // Predicated region
        $region37: #{tpu_custom_call.1} parent=11 // pred_check
          %p364 = pneg %p228
        $region38: #{tpu_custom_call.1} parent=11 // pred_check_branch
          %366 = sbr.rel (%p364) target = $region40
        $region39: #{tpu_custom_call.1} parent=11 // pred_region
          %s368 = ssub.s32 1024, 1024
          %369 = vsyncadd [#allocation13], %s368
          %s370 = sshll.u32 [#allocation12], 4
          %s371 = int_to_ptr.vmem [resolvable:$true] %s370
          %376 = dma.hbm_to_vmem [thread:$0]  %s8, 1024, %s371, [#allocation13], 64, 64, 4
        $region40: #{tpu_custom_call.1} parent=11 // pred_fallthru
          _
        // Predicated region
        $region41: #{tpu_custom_call.1} parent=11 // pred_check
          %p377 = pneg %p275
        $region42: #{tpu_custom_call.1} parent=11 // pred_check_branch
          %379 = sbr.rel (%p377) target = $region44
        $region43: #{tpu_custom_call.1} parent=11 // pred_region
          %s381 = ssub.s32 16, 16
          %382 = vsyncadd [#allocation5], %s381
          %s384 = sshll.u32 %s10, 4
          %s385 = int_to_ptr.vmem [resolvable:$true] %s384
          %387 = dma.vmem_to_smem %s385, 16, [#allocation14], [#allocation5]
        $region44: #{tpu_custom_call.1} parent=11 // pred_fallthru
          _
      $region12: #{tpu_custom_call.1} parent=5 // pred_fallthru
        _
      %p388 = scmp.lt.s32.totalorder %s29, 2
      // Predicated region
      $region45: #{tpu_custom_call.1} parent=5 // pred_check
        %p389 = pneg %p388
      $region46: #{tpu_custom_call.1} parent=5 // pred_check_branch
        %391 = sbr.rel (%p389) target = $region48
      $region47: #{tpu_custom_call.1} parent=5 // pred_region
        // Predicated region
        $region49: #{tpu_custom_call.1} parent=47 // pred_check
          %p392 = pneg %p49
        $region50: #{tpu_custom_call.1} parent=47 // pred_check_branch
          %394 = sbr.rel (%p392) target = $region52
        $region51: #{tpu_custom_call.1} parent=47 // pred_region
          %s395 = sand.u32 %s39, 1
          %s396 = scalar_lea.sflag [#allocation3], %s395
          %s397 = sand.u32 %s39, 1
          %s398 = smul.addr %s397, 8
          %s399 = scalar_lea.vmem [#allocation2], %s398
          %s401 = ssub.s32 128, 128
          %402 = vsyncadd %s396, %s401
          %s403 = smul.addr %s29, 2
          %s404 = smul.addr %s403, 64
          %s405 = scalar_lea.hbm %s0, %s404
          %s406 = sshll.u32 %s399, 4
          %s407 = int_to_ptr.vmem [resolvable:$true] %s406
          %412 = dma.hbm_to_vmem [thread:$0]  %s405, 128, %s407, %s396, 64, 64, 4
        $region52: #{tpu_custom_call.1} parent=47 // pred_fallthru
          _
        // Predicated region
        $region53: #{tpu_custom_call.1} parent=47 // pred_check
          %p413 = pneg %p75
        $region54: #{tpu_custom_call.1} parent=47 // pred_check_branch
          %415 = sbr.rel (%p413) target = $region56
        $region55: #{tpu_custom_call.1} parent=47 // pred_region
          %s416 = sand.u32 %s29, 1
          %s417 = scalar_lea.sflag [#allocation7], %s416
          %s418 = sand.u32 %s65, 1
          %s419 = smul.addr %s418, 4
          %s420 = scalar_lea.vmem [#allocation6], %s419
          %s422 = ssub.s32 64, 64
          %423 = vsyncadd %s417, %s422
          %s424 = smul.addr %s29, 64
          %s425 = scalar_lea.hbm %s1, %s424
          %s427 = sshll.u32 %s420, 4
          %s428 = int_to_ptr.vmem [resolvable:$true] %s427
          %430 = dma.hbm_to_vmem [thread:$0]  %s425, 64, %s428, %s417
        $region56: #{tpu_custom_call.1} parent=47 // pred_fallthru
          _
        // Predicated region
        $region57: #{tpu_custom_call.1} parent=47 // pred_check
          %p431 = pneg %p248
        $region58: #{tpu_custom_call.1} parent=47 // pred_check_branch
          %433 = sbr.rel (%p431) target = $region60
        $region59: #{tpu_custom_call.1} parent=47 // pred_region
          %p434 = scmp.lt.s32.totalorder %s29, 1
          %s435 = scalar_select %p434, %s29, 1
          %s436 = scalar_lea.vmem %s9, %s435
        $region60: #{tpu_custom_call.1} parent=47 // pred_fallthru
          _
      $region48: #{tpu_custom_call.1} parent=5 // pred_fallthru
        _
      %p437 = scmp.le.s32.totalorder 1, %s29
      %p438 = scmp.lt.s32.totalorder %s29, 3
      %p439 = pnand %p437, %p438
      %p440 = pneg %p439
      // Predicated region
      $region61: #{tpu_custom_call.1} parent=5 // pred_check
        _
      $region62: #{tpu_custom_call.1} parent=5 // pred_check_branch
        %442 = sbr.rel (%p439) target = $region64
      $region63: #{tpu_custom_call.1} parent=5 // pred_region
        %s443 = ssub.s32 %s29, 1
        %s444 = sand.u32 %s42, 1
        %s445 = scalar_lea.sflag [#allocation3], %s444
        %s446 = sand.u32 %s42, 1
        %s447 = smul.addr %s446, 8
        %s448 = scalar_lea.vmem [#allocation2], %s447
        // Predicated region
        $region65: #{tpu_custom_call.1} parent=63 // pred_check
          %p449 = pneg %p55
        $region66: #{tpu_custom_call.1} parent=63 // pred_check_branch
          %451 = sbr.rel (%p449) target = $region68
        $region67: #{tpu_custom_call.1} parent=63 // pred_region
          %452 = dma.done %s445, 128
        $region68: #{tpu_custom_call.1} parent=63 // pred_fallthru
          _
        %s453 = sand.u32 %s34, 1
        %s454 = scalar_lea.sflag [#allocation7], %s453
        %s455 = sand.u32 %s68, 1
        %s456 = smul.addr %s455, 4
        %s457 = scalar_lea.vmem [#allocation6], %s456
        // Predicated region
        $region69: #{tpu_custom_call.1} parent=63 // pred_check
          %p458 = pneg %p81
        $region70: #{tpu_custom_call.1} parent=63 // pred_check_branch
          %460 = sbr.rel (%p458) target = $region72
        $region71: #{tpu_custom_call.1} parent=63 // pred_region
          %461 = dma.done %s454, 64
        $region72: #{tpu_custom_call.1} parent=63 // pred_fallthru
          _
        // Predicated region
        $region73: #{tpu_custom_call.1} parent=63 // pred_check
          %p462 = pneg %p102
        $region74: #{tpu_custom_call.1} parent=63 // pred_check_branch
          %464 = sbr.rel (%p462) target = $region76
        $region75: #{tpu_custom_call.1} parent=63 // pred_region
          %465 = dma.done [#allocation7], 2048
        $region76: #{tpu_custom_call.1} parent=63 // pred_fallthru
          _
        // Predicated region
        $region77: #{tpu_custom_call.1} parent=63 // pred_check
          %p466 = pneg %p144
        $region78: #{tpu_custom_call.1} parent=63 // pred_check_branch
          %468 = sbr.rel (%p466) target = $region80
        $region79: #{tpu_custom_call.1} parent=63 // pred_region
          %469 = dma.done [#allocation10], 4096
        $region80: #{tpu_custom_call.1} parent=63 // pred_fallthru
          _
        // Predicated region
        $region81: #{tpu_custom_call.1} parent=63 // pred_check
          %p470 = pneg %p186
        $region82: #{tpu_custom_call.1} parent=63 // pred_check_branch
          %472 = sbr.rel (%p470) target = $region84
        $region83: #{tpu_custom_call.1} parent=63 // pred_region
          %473 = dma.done [#allocation10], 2048
        $region84: #{tpu_custom_call.1} parent=63 // pred_fallthru
          _
        // Predicated region
        $region85: #{tpu_custom_call.1} parent=63 // pred_check
          %p474 = pneg %p228
        $region86: #{tpu_custom_call.1} parent=63 // pred_check_branch
          %476 = sbr.rel (%p474) target = $region88
        $region87: #{tpu_custom_call.1} parent=63 // pred_region
          %477 = dma.done [#allocation13], 1024
        $region88: #{tpu_custom_call.1} parent=63 // pred_fallthru
          _
        // Predicated region
        $region89: #{tpu_custom_call.1} parent=63 // pred_check
          %p478 = pneg %p275
        $region90: #{tpu_custom_call.1} parent=63 // pred_check_branch
          %480 = sbr.rel (%p478) target = $region92
        $region91: #{tpu_custom_call.1} parent=63 // pred_region
          %481 = dma.done [#allocation5], 16
        $region92: #{tpu_custom_call.1} parent=63 // pred_fallthru
          _
        %482 = sfence
        %s483 = sand.u32 %s42, 1
        %s484 = scalar_lea.sflag [#allocation3], %s483
        %s485 = sand.u32 %s42, 1
        %s486 = smul.addr %s485, 8
        %s487 = scalar_lea.vmem [#allocation2], %s486
        %p488 = pneg %p55
        %p489 = pneg %p52
        %s490 = sand.u32 %s34, 1
        %s491 = scalar_lea.sflag [#allocation7], %s490
        %s492 = sand.u32 %s68, 1
        %s493 = smul.addr %s492, 4
        %s494 = scalar_lea.vmem [#allocation6], %s493
        %p495 = pneg %p81
        %p496 = pneg %p78
        %p497 = pneg %p102
        %p498 = pneg %p99
        %p499 = pneg %p123
        %p500 = pneg %p120
        %p501 = pneg %p144
        %p502 = pneg %p141
        %p503 = pneg %p165
        %p504 = pneg %p162
        %p505 = pneg %p186
        %p506 = pneg %p183
        %p507 = pneg %p207
        %p508 = pneg %p204
        %p509 = pneg %p228
        %p510 = pneg %p225
        %p511 = scmp.lt.s32.totalorder %s34, 1
        %s512 = scalar_select %p511, %s34, 1
        %s513 = scalar_lea.vmem %s9, %s512
        %p514 = pneg %p254
        %p515 = pneg %p251
        %p516 = pneg %p275
        %p517 = pneg %p272
        %p518 = pneg %p301
        %p519 = pneg %p298
        %s520 = sand.u32 %s288, 1
        %s521 = scalar_lea.sflag [#allocation4], %s520
        %s522 = sand.u32 %s288, 1
        %s523 = scalar_lea.vmem [#allocation15], %s522
        %p524 = scmp.lt.s32.totalorder %s34, 1
        %s525 = scalar_select %p524, %s34, 1
        %s526 = scalar_lea.vmem %s9, %s525
        %v528 = vld [vmem:[%s457] sm:$0xf]
        %v529 = vld [vmem:[%s448] sm:$0xf]
        %v530 = vld [vmem:[%s448 + $0x4] sm:$0xf]
        %s531 = sld [smem:[#allocation14]]
        %v532 = vld [vmem:[#allocation8] sm:$0xff]
        %v533 = vld [vmem:[#allocation8 + $0x8] sm:$0xff]
        %v534 = vld [vmem:[#allocation8 + $0x10] sm:$0xff]
        %v535 = vld [vmem:[#allocation8 + $0x18] sm:$0xff]
        %v536 = vld [vmem:[#allocation8 + $0x20] sm:$0xff]
        %v537 = vld [vmem:[#allocation8 + $0x28] sm:$0xff]
        %v538 = vld [vmem:[#allocation8 + $0x30] sm:$0xff]
        %v539 = vld [vmem:[#allocation8 + $0x38] sm:$0xff]
        %v540 = vld [vmem:[#allocation8 + $0x40] sm:$0xff]
        %v541 = vld [vmem:[#allocation8 + $0x48] sm:$0xff]
        %v542 = vld [vmem:[#allocation8 + $0x50] sm:$0xff]
        %v543 = vld [vmem:[#allocation8 + $0x58] sm:$0xff]
        %v544 = vld [vmem:[#allocation8 + $0x60] sm:$0xff]
        %v545 = vld [vmem:[#allocation8 + $0x68] sm:$0xff]
        %v546 = vld [vmem:[#allocation8 + $0x70] sm:$0xff]
        %v547 = vld [vmem:[#allocation8 + $0x78] sm:$0xff]
        %v550 = vunpack.c.l.b16 %v529
        %v551 = vunpack.c.l.b16 %v530
        %v552 = vpack.c.b16 %v551, %v550
        %v570 = vunpack.c.l.b16 %v532
        %v571 = vunpack.c.h.b16 %v532
        %v572 = vunpack.c.l.b16 %v533
        %v573 = vunpack.c.h.b16 %v533
        %v574 = vunpack.c.l.b16 %v534
        %v575 = vunpack.c.h.b16 %v534
        %v576 = vunpack.c.l.b16 %v535
        %v577 = vunpack.c.h.b16 %v535
        %v578 = vunpack.c.l.b16 %v536
        %v579 = vunpack.c.h.b16 %v536
        %v580 = vunpack.c.l.b16 %v537
        %v581 = vunpack.c.h.b16 %v537
        %v582 = vunpack.c.l.b16 %v538
        %v583 = vunpack.c.h.b16 %v538
        %v584 = vunpack.c.l.b16 %v539
        %v585 = vunpack.c.h.b16 %v539
        %v586 = vunpack.c.l.b16 %v540
        %v587 = vunpack.c.h.b16 %v540
        %v588 = vunpack.c.l.b16 %v541
        %v589 = vunpack.c.h.b16 %v541
        %v590 = vunpack.c.l.b16 %v542
        %v591 = vunpack.c.h.b16 %v542
        %v592 = vunpack.c.l.b16 %v543
        %v593 = vunpack.c.h.b16 %v543
        %v594 = vunpack.c.l.b16 %v544
        %v595 = vunpack.c.h.b16 %v544
        %v596 = vunpack.c.l.b16 %v545
        %v597 = vunpack.c.h.b16 %v545
        %v598 = vunpack.c.l.b16 %v546
        %v599 = vunpack.c.h.b16 %v546
        %v600 = vunpack.c.l.b16 %v547
        %v601 = vunpack.c.h.b16 %v547
        %v602 = vpack.c.b16 %v572, %v570
        %v603 = vpack.c.b16 %v573, %v571
        %v604 = vpack.c.b16 %v576, %v574
        %v605 = vpack.c.b16 %v577, %v575
        %v606 = vpack.c.b16 %v580, %v578
        %v607 = vpack.c.b16 %v581, %v579
        %v608 = vpack.c.b16 %v584, %v582
        %v609 = vpack.c.b16 %v585, %v583
        %v610 = vpack.c.b16 %v588, %v586
        %v611 = vpack.c.b16 %v589, %v587
        %v612 = vpack.c.b16 %v592, %v590
        %v613 = vpack.c.b16 %v593, %v591
        %v614 = vpack.c.b16 %v596, %v594
        %v615 = vpack.c.b16 %v597, %v595
        %v616 = vpack.c.b16 %v600, %v598
        %v617 = vpack.c.b16 %v601, %v599
        %634 = vmatprep.subr.bf16.mxu0 %v603
        %635 = vmatpush1.bf16.msra.mxu0 %v602
        %636 = vmatprep.subr.bf16.mxu0 %v605
        %637 = vmatpush1.bf16.msra.mxu0 %v604
        %638 = vmatprep.subr.bf16.mxu0 %v607
        %639 = vmatpush1.bf16.msra.mxu0 %v606
        %640 = vmatprep.subr.bf16.mxu0 %v609
        %641 = vmatpush1.bf16.msra.mxu0 %v608
        %642 = vmatprep.subr.bf16.mxu0 %v611
        %643 = vmatpush1.bf16.msra.mxu0 %v610
        %644 = vmatprep.subr.bf16.mxu0 %v613
        %645 = vmatpush1.bf16.msra.mxu0 %v612
        %646 = vmatprep.subr.bf16.mxu0 %v615
        %647 = vmatpush1.bf16.msra.mxu0 %v614
        %648 = vmatprep.subr.bf16.mxu0 %v617
        %649 = vmatpush1.bf16.msra.mxu0 %v616
        %650 = vmatprep.subr.bf16.mxu0 0
        %651 = vmatpush1.bf16.msra.mxu0 0
        %652 = vmatprep.subr.bf16.mxu0 0
        %653 = vmatpush1.bf16.msra.mxu0 0
        %654 = vmatprep.subr.bf16.mxu0 0
        %655 = vmatpush1.bf16.msra.mxu0 0
        %656 = vmatprep.subr.bf16.mxu0 0
        %657 = vmatpush1.bf16.msra.mxu0 0
        %658 = vmatprep.subr.bf16.mxu0 0
        %659 = vmatpush1.bf16.msra.mxu0 0
        %660 = vmatprep.subr.bf16.mxu0 0
        %661 = vmatpush1.bf16.msra.mxu0 0
        %662 = vmatprep.subr.bf16.mxu0 0
        %663 = vmatpush1.bf16.msra.mxu0 0
        %664 = vmatprep.subr.bf16.mxu0 0
        %665 = vmatpush1.bf16.msra.mxu0 0
        %666 = vmatprep.mubr.bf16.mxu0 0
        %667 = vmatmul.mubr.bf16.gmra.mrb[0].mxu0 %v552
        %v668 = vpop.f32.mrb[0].mxu0
        %v669 = vadd.f32 0.0, %v668
        %v670 = vpop.f32.mrb[0].mxu0
        %v671 = vadd.f32 0.0, %v670
        %v672 = vpop.f32.mrb[0].mxu0
        %v673 = vadd.f32 0.0, %v672
        %v674 = vpop.f32.mrb[0].mxu0
        %v675 = vadd.f32 0.0, %v674
        %676 = vdwg.mxu0
        %v677 = vpack.c.bf16 %v669, %v669
        %v678 = vpack.c.bf16 %v671, %v671
        %v679 = vpack.c.bf16 %v673, %v673
        %v680 = vpack.c.bf16 %v675, %v675
        %v681 = vld [vmem:[%s3] sm:$0xf]
        %v683 = vlaneseq
        %v684 = vshrl.u32 %v683, 7
        %v685 = vsub.s32 0, %v684
        %v686 = vrot.slane %v681, %v685
        %v687 = vlaneseq
        %v688 = vshrl.u32 %v687, 7
        %v689 = vsub.s32 1, %v688
        %v690 = vrot.slane %v681, %v689
        %v691 = vlaneseq
        %v692 = vshrl.u32 %v691, 7
        %v693 = vsub.s32 2, %v692
        %v694 = vrot.slane %v681, %v693
        %v695 = vlaneseq
        %v696 = vshrl.u32 %v695, 7
        %v697 = vsub.s32 3, %v696
        %v698 = vrot.slane %v681, %v697
        %vm703 = vcmask 64512
        %v705 = vsel %vm703, %v528, 0
        %vm707 = vcmask 1043456
        %v709 = vsel %vm707, %v677, 0
        %v712 = vsel %vm707, %v678, 0
        %v715 = vsel %vm707, %v679, 0
        %v718 = vsel %vm707, %v680, 0
        %720 = vmatprep.subr.bf16.mxu0 %v712
        %721 = vmatpush1.bf16.msra.mxu0 %v709
        %722 = vmatprep.subr.bf16.mxu0 0
        %723 = vmatpush1.bf16.msra.mxu0 0
        %724 = vmatprep.subr.bf16.mxu0 0
        %725 = vmatpush1.bf16.msra.mxu0 0
        %726 = vmatprep.subr.bf16.mxu0 0
        %727 = vmatpush1.bf16.msra.mxu0 0
        %728 = vmatprep.subr.bf16.mxu0 0
        %729 = vmatpush1.bf16.msra.mxu0 0
        %730 = vmatprep.subr.bf16.mxu0 0
        %731 = vmatpush1.bf16.msra.mxu0 0
        %732 = vmatprep.subr.bf16.mxu0 0
        %733 = vmatpush1.bf16.msra.mxu0 0
        %734 = vmatprep.subr.bf16.mxu0 0
        %735 = vmatpush1.bf16.msra.mxu0 0
        %736 = vmatprep.subr.bf16.mxu0 0
        %737 = vmatpush1.bf16.msra.mxu0 0
        %738 = vmatprep.subr.bf16.mxu0 0
        %739 = vmatpush1.bf16.msra.mxu0 0
        %740 = vmatprep.subr.bf16.mxu0 0
        %741 = vmatpush1.bf16.msra.mxu0 0
        %742 = vmatprep.subr.bf16.mxu0 0
        %743 = vmatpush1.bf16.msra.mxu0 0
        %744 = vmatprep.subr.bf16.mxu0 0
        %745 = vmatpush1.bf16.msra.mxu0 0
        %746 = vmatprep.subr.bf16.mxu0 0
        %747 = vmatpush1.bf16.msra.mxu0 0
        %748 = vmatprep.subr.bf16.mxu0 0
        %749 = vmatpush1.bf16.msra.mxu0 0
        %750 = vmatprep.subr.bf16.mxu0 0
        %751 = vmatpush1.bf16.msra.mxu0 0
        %752 = vmatprep.mubr.bf16.mxu0 0
        %753 = vmatmul.mubr.bf16.gmra.mrb[0].mxu0 %v705
        %v754 = vpop.f32.mrb[0].mxu0
        %v755 = vadd.f32 %v686, %v754
        %v756 = vpop.f32.mrb[0].mxu0
        %v757 = vadd.f32 %v690, %v756
        %v758 = vpop.f32.mrb[0].mxu0
        %v759 = vpop.f32.mrb[0].mxu0
        %760 = vdwg.mxu0
        %761 = vmatprep.subr.bf16.mxu0 %v718
        %762 = vmatpush1.bf16.msra.mxu0 %v715
        %763 = vmatprep.subr.bf16.mxu0 0
        %764 = vmatpush1.bf16.msra.mxu0 0
        %765 = vmatprep.subr.bf16.mxu0 0
        %766 = vmatpush1.bf16.msra.mxu0 0
        %767 = vmatprep.subr.bf16.mxu0 0
        %768 = vmatpush1.bf16.msra.mxu0 0
        %769 = vmatprep.subr.bf16.mxu0 0
        %770 = vmatpush1.bf16.msra.mxu0 0
        %771 = vmatprep.subr.bf16.mxu0 0
        %772 = vmatpush1.bf16.msra.mxu0 0
        %773 = vmatprep.subr.bf16.mxu0 0
        %774 = vmatpush1.bf16.msra.mxu0 0
        %775 = vmatprep.subr.bf16.mxu0 0
        %776 = vmatpush1.bf16.msra.mxu0 0
        %777 = vmatprep.subr.bf16.mxu0 0
        %778 = vmatpush1.bf16.msra.mxu0 0
        %779 = vmatprep.subr.bf16.mxu0 0
        %780 = vmatpush1.bf16.msra.mxu0 0
        %781 = vmatprep.subr.bf16.mxu0 0
        %782 = vmatpush1.bf16.msra.mxu0 0
        %783 = vmatprep.subr.bf16.mxu0 0
        %784 = vmatpush1.bf16.msra.mxu0 0
        %785 = vmatprep.subr.bf16.mxu0 0
        %786 = vmatpush1.bf16.msra.mxu0 0
        %787 = vmatprep.subr.bf16.mxu0 0
        %788 = vmatpush1.bf16.msra.mxu0 0
        %789 = vmatprep.subr.bf16.mxu0 0
        %790 = vmatpush1.bf16.msra.mxu0 0
        %791 = vmatprep.subr.bf16.mxu0 0
        %792 = vmatpush1.bf16.msra.mxu0 0
        %793 = vmatprep.mubr.bf16.mxu0 0
        %794 = vmatmul.mubr.bf16.gmra.mrb[0].mxu0 %v705
        %v795 = vpop.f32.mrb[0].mxu0
        %v796 = vadd.f32 %v694, %v795
        %v797 = vpop.f32.mrb[0].mxu0
        %v798 = vadd.f32 %v698, %v797
        %v799 = vpop.f32.mrb[0].mxu0
        %v800 = vpop.f32.mrb[0].mxu0
        %801 = vdwg.mxu0
        %vm802 = vcmp.gt.f32.partialorder %v755, 0.0
        %vm803 = vcmp.gt.f32.partialorder %v757, 0.0
        %vm804 = vcmp.gt.f32.partialorder %v796, 0.0
        %vm805 = vcmp.gt.f32.partialorder %v798, 0.0
        %v806 = vstv %s531
        %v807 = vmul.f32 %v806, %v755
        %v808 = vmul.f32 %v806, %v757
        %v809 = vmul.f32 %v806, %v796
        %v810 = vmul.f32 %v806, %v798
        %v811 = vsel %vm802, %v755, %v807
        %v812 = vsel %vm803, %v757, %v808
        %v813 = vsel %vm804, %v796, %v809
        %v814 = vsel %vm805, %v798, %v810
        %v815 = vpack.c.bf16 %v813, %v811
        %v816 = vpack.c.bf16 %v814, %v812
        %s817 = sld [smem:[#allocation14 + $0x1]]
        %v818 = vld [vmem:[#allocation9] sm:$0xff]
        %v819 = vld [vmem:[#allocation9 + $0x8] sm:$0xff]
        %v820 = vld [vmem:[#allocation9 + $0x10] sm:$0xff]
        %v821 = vld [vmem:[#allocation9 + $0x18] sm:$0xff]
        %v822 = vld [vmem:[#allocation9 + $0x20] sm:$0xff]
        %v823 = vld [vmem:[#allocation9 + $0x28] sm:$0xff]
        %v824 = vld [vmem:[#allocation9 + $0x30] sm:$0xff]
        %v825 = vld [vmem:[#allocation9 + $0x38] sm:$0xff]
        %v826 = vld [vmem:[#allocation9 + $0x40] sm:$0xff]
        %v827 = vld [vmem:[#allocation9 + $0x48] sm:$0xff]
        %v828 = vld [vmem:[#allocation9 + $0x50] sm:$0xff]
        %v829 = vld [vmem:[#allocation9 + $0x58] sm:$0xff]
        %v830 = vld [vmem:[#allocation9 + $0x60] sm:$0xff]
        %v831 = vld [vmem:[#allocation9 + $0x68] sm:$0xff]
        %v832 = vld [vmem:[#allocation9 + $0x70] sm:$0xff]
        %v833 = vld [vmem:[#allocation9 + $0x78] sm:$0xff]
        %v834 = vld [vmem:[#allocation9 + $0x80] sm:$0xff]
        %v835 = vld [vmem:[#allocation9 + $0x88] sm:$0xff]
        %v836 = vld [vmem:[#allocation9 + $0x90] sm:$0xff]
        %v837 = vld [vmem:[#allocation9 + $0x98] sm:$0xff]
        %v838 = vld [vmem:[#allocation9 + $0xa0] sm:$0xff]
        %v839 = vld [vmem:[#allocation9 + $0xa8] sm:$0xff]
        %v840 = vld [vmem:[#allocation9 + $0xb0] sm:$0xff]
        %v841 = vld [vmem:[#allocation9 + $0xb8] sm:$0xff]
        %v842 = vld [vmem:[#allocation9 + $0xc0] sm:$0xff]
        %v843 = vld [vmem:[#allocation9 + $0xc8] sm:$0xff]
        %v844 = vld [vmem:[#allocation9 + $0xd0] sm:$0xff]
        %v845 = vld [vmem:[#allocation9 + $0xd8] sm:$0xff]
        %v846 = vld [vmem:[#allocation9 + $0xe0] sm:$0xff]
        %v847 = vld [vmem:[#allocation9 + $0xe8] sm:$0xff]
        %v848 = vld [vmem:[#allocation9 + $0xf0] sm:$0xff]
        %v849 = vld [vmem:[#allocation9 + $0xf8] sm:$0xff]
        %v882 = vunpack.c.l.b16 %v818
        %v883 = vunpack.c.h.b16 %v818
        %v884 = vunpack.c.l.b16 %v819
        %v885 = vunpack.c.h.b16 %v819
        %v886 = vunpack.c.l.b16 %v820
        %v887 = vunpack.c.h.b16 %v820
        %v888 = vunpack.c.l.b16 %v821
        %v889 = vunpack.c.h.b16 %v821
        %v890 = vunpack.c.l.b16 %v822
        %v891 = vunpack.c.h.b16 %v822
        %v892 = vunpack.c.l.b16 %v823
        %v893 = vunpack.c.h.b16 %v823
        %v894 = vunpack.c.l.b16 %v824
        %v895 = vunpack.c.h.b16 %v824
        %v896 = vunpack.c.l.b16 %v825
        %v897 = vunpack.c.h.b16 %v825
        %v898 = vunpack.c.l.b16 %v826
        %v899 = vunpack.c.h.b16 %v826
        %v900 = vunpack.c.l.b16 %v827
        %v901 = vunpack.c.h.b16 %v827
        %v902 = vunpack.c.l.b16 %v828
        %v903 = vunpack.c.h.b16 %v828
        %v904 = vunpack.c.l.b16 %v829
        %v905 = vunpack.c.h.b16 %v829
        %v906 = vunpack.c.l.b16 %v830
        %v907 = vunpack.c.h.b16 %v830
        %v908 = vunpack.c.l.b16 %v831
        %v909 = vunpack.c.h.b16 %v831
        %v910 = vunpack.c.l.b16 %v832
        %v911 = vunpack.c.h.b16 %v832
        %v912 = vunpack.c.l.b16 %v833
        %v913 = vunpack.c.h.b16 %v833
        %v914 = vunpack.c.l.b16 %v834
        %v915 = vunpack.c.h.b16 %v834
        %v916 = vunpack.c.l.b16 %v835
        %v917 = vunpack.c.h.b16 %v835
        %v918 = vunpack.c.l.b16 %v836
        %v919 = vunpack.c.h.b16 %v836
        %v920 = vunpack.c.l.b16 %v837
        %v921 = vunpack.c.h.b16 %v837
        %v922 = vunpack.c.l.b16 %v838
        %v923 = vunpack.c.h.b16 %v838
        %v924 = vunpack.c.l.b16 %v839
        %v925 = vunpack.c.h.b16 %v839
        %v926 = vunpack.c.l.b16 %v840
        %v927 = vunpack.c.h.b16 %v840
        %v928 = vunpack.c.l.b16 %v841
        %v929 = vunpack.c.h.b16 %v841
        %v930 = vunpack.c.l.b16 %v842
        %v931 = vunpack.c.h.b16 %v842
        %v932 = vunpack.c.l.b16 %v843
        %v933 = vunpack.c.h.b16 %v843
        %v934 = vunpack.c.l.b16 %v844
        %v935 = vunpack.c.h.b16 %v844
        %v936 = vunpack.c.l.b16 %v845
        %v937 = vunpack.c.h.b16 %v845
        %v938 = vunpack.c.l.b16 %v846
        %v939 = vunpack.c.h.b16 %v846
        %v940 = vunpack.c.l.b16 %v847
        %v941 = vunpack.c.h.b16 %v847
        %v942 = vunpack.c.l.b16 %v848
        %v943 = vunpack.c.h.b16 %v848
        %v944 = vunpack.c.l.b16 %v849
        %v945 = vunpack.c.h.b16 %v849
        %v946 = vpack.c.b16 %v884, %v882
        %v947 = vpack.c.b16 %v885, %v883
        %v948 = vpack.c.b16 %v888, %v886
        %v949 = vpack.c.b16 %v889, %v887
        %v950 = vpack.c.b16 %v892, %v890
        %v951 = vpack.c.b16 %v893, %v891
        %v952 = vpack.c.b16 %v896, %v894
        %v953 = vpack.c.b16 %v897, %v895
        %v954 = vpack.c.b16 %v900, %v898
        %v955 = vpack.c.b16 %v901, %v899
        %v956 = vpack.c.b16 %v904, %v902
        %v957 = vpack.c.b16 %v905, %v903
        %v958 = vpack.c.b16 %v908, %v906
        %v959 = vpack.c.b16 %v909, %v907
        %v960 = vpack.c.b16 %v912, %v910
        %v961 = vpack.c.b16 %v913, %v911
        %v962 = vpack.c.b16 %v916, %v914
        %v963 = vpack.c.b16 %v917, %v915
        %v964 = vpack.c.b16 %v920, %v918
        %v965 = vpack.c.b16 %v921, %v919
        %v966 = vpack.c.b16 %v924, %v922
        %v967 = vpack.c.b16 %v925, %v923
        %v968 = vpack.c.b16 %v928, %v926
        %v969 = vpack.c.b16 %v929, %v927
        %v970 = vpack.c.b16 %v932, %v930
        %v971 = vpack.c.b16 %v933, %v931
        %v972 = vpack.c.b16 %v936, %v934
        %v973 = vpack.c.b16 %v937, %v935
        %v974 = vpack.c.b16 %v940, %v938
        %v975 = vpack.c.b16 %v941, %v939
        %v976 = vpack.c.b16 %v944, %v942
        %v977 = vpack.c.b16 %v945, %v943
        %1010 = vmatprep.subr.bf16.mxu0 %v947
        %1011 = vmatpush1.bf16.msra.mxu0 %v946
        %1012 = vmatprep.subr.bf16.mxu0 %v949
        %1013 = vmatpush1.bf16.msra.mxu0 %v948
        %1014 = vmatprep.subr.bf16.mxu0 %v951
        %1015 = vmatpush1.bf16.msra.mxu0 %v950
        %1016 = vmatprep.subr.bf16.mxu0 %v953
        %1017 = vmatpush1.bf16.msra.mxu0 %v952
        %1018 = vmatprep.subr.bf16.mxu0 %v955
        %1019 = vmatpush1.bf16.msra.mxu0 %v954
        %1020 = vmatprep.subr.bf16.mxu0 %v957
        %1021 = vmatpush1.bf16.msra.mxu0 %v956
        %1022 = vmatprep.subr.bf16.mxu0 %v959
        %1023 = vmatpush1.bf16.msra.mxu0 %v958
        %1024 = vmatprep.subr.bf16.mxu0 %v961
        %1025 = vmatpush1.bf16.msra.mxu0 %v960
        %1026 = vmatprep.subr.bf16.mxu0 %v963
        %1027 = vmatpush1.bf16.msra.mxu0 %v962
        %1028 = vmatprep.subr.bf16.mxu0 %v965
        %1029 = vmatpush1.bf16.msra.mxu0 %v964
        %1030 = vmatprep.subr.bf16.mxu0 %v967
        %1031 = vmatpush1.bf16.msra.mxu0 %v966
        %1032 = vmatprep.subr.bf16.mxu0 %v969
        %1033 = vmatpush1.bf16.msra.mxu0 %v968
        %1034 = vmatprep.subr.bf16.mxu0 %v971
        %1035 = vmatpush1.bf16.msra.mxu0 %v970
        %1036 = vmatprep.subr.bf16.mxu0 %v973
        %1037 = vmatpush1.bf16.msra.mxu0 %v972
        %1038 = vmatprep.subr.bf16.mxu0 %v975
        %1039 = vmatpush1.bf16.msra.mxu0 %v974
        %1040 = vmatprep.subr.bf16.mxu0 %v977
        %1041 = vmatpush1.bf16.msra.mxu0 %v976
        %1042 = vmatprep.mubr.bf16.mxu0 %v816
        %1043 = vmatmul.mubr.bf16.gmra.mrb[0].mxu0 %v815
        %v1044 = vpop.f32.mrb[0].mxu0
        %v1045 = vadd.f32 0.0, %v1044
        %v1046 = vpop.f32.mrb[0].mxu0
        %v1047 = vadd.f32 0.0, %v1046
        %v1048 = vpop.f32.mrb[0].mxu0
        %v1049 = vadd.f32 0.0, %v1048
        %v1050 = vpop.f32.mrb[0].mxu0
        %v1051 = vadd.f32 0.0, %v1050
        %1052 = vdwg.mxu0
        %v1053 = vpack.c.bf16 %v1045, %v1045
        %v1054 = vpack.c.bf16 %v1047, %v1047
        %v1055 = vpack.c.bf16 %v1049, %v1049
        %v1056 = vpack.c.bf16 %v1051, %v1051
        %v1057 = vld [vmem:[%s5] sm:$0xf]
        %v1059 = vlaneseq
        %v1060 = vshrl.u32 %v1059, 7
        %v1061 = vsub.s32 0, %v1060
        %v1062 = vrot.slane %v1057, %v1061
        %v1063 = vlaneseq
        %v1064 = vshrl.u32 %v1063, 7
        %v1065 = vsub.s32 1, %v1064
        %v1066 = vrot.slane %v1057, %v1065
        %v1067 = vlaneseq
        %v1068 = vshrl.u32 %v1067, 7
        %v1069 = vsub.s32 2, %v1068
        %v1070 = vrot.slane %v1057, %v1069
        %v1071 = vlaneseq
        %v1072 = vshrl.u32 %v1071, 7
        %v1073 = vsub.s32 3, %v1072
        %v1074 = vrot.slane %v1057, %v1073
        %v1080 = vsel %vm707, %v1053, 0
        %v1083 = vsel %vm707, %v1054, 0
        %v1086 = vsel %vm707, %v1055, 0
        %v1089 = vsel %vm707, %v1056, 0
        %1091 = vmatprep.subr.bf16.mxu0 %v1083
        %1092 = vmatpush1.bf16.msra.mxu0 %v1080
        %1093 = vmatprep.subr.bf16.mxu0 0
        %1094 = vmatpush1.bf16.msra.mxu0 0
        %1095 = vmatprep.subr.bf16.mxu0 0
        %1096 = vmatpush1.bf16.msra.mxu0 0
        %1097 = vmatprep.subr.bf16.mxu0 0
        %1098 = vmatpush1.bf16.msra.mxu0 0
        %1099 = vmatprep.subr.bf16.mxu0 0
        %1100 = vmatpush1.bf16.msra.mxu0 0
        %1101 = vmatprep.subr.bf16.mxu0 0
        %1102 = vmatpush1.bf16.msra.mxu0 0
        %1103 = vmatprep.subr.bf16.mxu0 0
        %1104 = vmatpush1.bf16.msra.mxu0 0
        %1105 = vmatprep.subr.bf16.mxu0 0
        %1106 = vmatpush1.bf16.msra.mxu0 0
        %1107 = vmatprep.subr.bf16.mxu0 0
        %1108 = vmatpush1.bf16.msra.mxu0 0
        %1109 = vmatprep.subr.bf16.mxu0 0
        %1110 = vmatpush1.bf16.msra.mxu0 0
        %1111 = vmatprep.subr.bf16.mxu0 0
        %1112 = vmatpush1.bf16.msra.mxu0 0
        %1113 = vmatprep.subr.bf16.mxu0 0
        %1114 = vmatpush1.bf16.msra.mxu0 0
        %1115 = vmatprep.subr.bf16.mxu0 0
        %1116 = vmatpush1.bf16.msra.mxu0 0
        %1117 = vmatprep.subr.bf16.mxu0 0
        %1118 = vmatpush1.bf16.msra.mxu0 0
        %1119 = vmatprep.subr.bf16.mxu0 0
        %1120 = vmatpush1.bf16.msra.mxu0 0
        %1121 = vmatprep.subr.bf16.mxu0 0
        %1122 = vmatpush1.bf16.msra.mxu0 0
        %1123 = vmatprep.mubr.bf16.mxu0 0
        %1124 = vmatmul.mubr.bf16.gmra.mrb[0].mxu0 %v705
        %v1125 = vpop.f32.mrb[0].mxu0
        %v1126 = vadd.f32 %v1062, %v1125
        %v1127 = vpop.f32.mrb[0].mxu0
        %v1128 = vadd.f32 %v1066, %v1127
        %v1129 = vpop.f32.mrb[0].mxu0
        %v1130 = vpop.f32.mrb[0].mxu0
        %1131 = vdwg.mxu0
        %1132 = vmatprep.subr.bf16.mxu0 %v1089
        %1133 = vmatpush1.bf16.msra.mxu0 %v1086
        %1134 = vmatprep.subr.bf16.mxu0 0
        %1135 = vmatpush1.bf16.msra.mxu0 0
        %1136 = vmatprep.subr.bf16.mxu0 0
        %1137 = vmatpush1.bf16.msra.mxu0 0
        %1138 = vmatprep.subr.bf16.mxu0 0
        %1139 = vmatpush1.bf16.msra.mxu0 0
        %1140 = vmatprep.subr.bf16.mxu0 0
        %1141 = vmatpush1.bf16.msra.mxu0 0
        %1142 = vmatprep.subr.bf16.mxu0 0
        %1143 = vmatpush1.bf16.msra.mxu0 0
        %1144 = vmatprep.subr.bf16.mxu0 0
        %1145 = vmatpush1.bf16.msra.mxu0 0
        %1146 = vmatprep.subr.bf16.mxu0 0
        %1147 = vmatpush1.bf16.msra.mxu0 0
        %1148 = vmatprep.subr.bf16.mxu0 0
        %1149 = vmatpush1.bf16.msra.mxu0 0
        %1150 = vmatprep.subr.bf16.mxu0 0
        %1151 = vmatpush1.bf16.msra.mxu0 0
        %1152 = vmatprep.subr.bf16.mxu0 0
        %1153 = vmatpush1.bf16.msra.mxu0 0
        %1154 = vmatprep.subr.bf16.mxu0 0
        %1155 = vmatpush1.bf16.msra.mxu0 0
        %1156 = vmatprep.subr.bf16.mxu0 0
        %1157 = vmatpush1.bf16.msra.mxu0 0
        %1158 = vmatprep.subr.bf16.mxu0 0
        %1159 = vmatpush1.bf16.msra.mxu0 0
        %1160 = vmatprep.subr.bf16.mxu0 0
        %1161 = vmatpush1.bf16.msra.mxu0 0
        %1162 = vmatprep.subr.bf16.mxu0 0
        %1163 = vmatpush1.bf16.msra.mxu0 0
        %1164 = vmatprep.mubr.bf16.mxu0 0
        %1165 = vmatmul.mubr.bf16.gmra.mrb[0].mxu0 %v705
        %v1166 = vpop.f32.mrb[0].mxu0
        %v1167 = vadd.f32 %v1070, %v1166
        %v1168 = vpop.f32.mrb[0].mxu0
        %v1169 = vadd.f32 %v1074, %v1168
        %v1170 = vpop.f32.mrb[0].mxu0
        %v1171 = vpop.f32.mrb[0].mxu0
        %1172 = vdwg.mxu0
        %vm1173 = vcmp.gt.f32.partialorder %v1126, 0.0
        %vm1174 = vcmp.gt.f32.partialorder %v1128, 0.0
        %vm1175 = vcmp.gt.f32.partialorder %v1167, 0.0
        %vm1176 = vcmp.gt.f32.partialorder %v1169, 0.0
        %v1177 = vstv %s817
        %v1178 = vmul.f32 %v1177, %v1126
        %v1179 = vmul.f32 %v1177, %v1128
        %v1180 = vmul.f32 %v1177, %v1167
        %v1181 = vmul.f32 %v1177, %v1169
        %v1182 = vsel %vm1173, %v1126, %v1178
        %v1183 = vsel %vm1174, %v1128, %v1179
        %v1184 = vsel %vm1175, %v1167, %v1180
        %v1185 = vsel %vm1176, %v1169, %v1181
        %v1186 = vpack.c.bf16 %v1184, %v1182
        %v1187 = vpack.c.bf16 %v1185, %v1183
        %s1188 = sld [smem:[#allocation14 + $0x2]]
        %v1189 = vld [vmem:[#allocation11] sm:$0xf]
        %v1190 = vld [vmem:[#allocation11 + $0x4] sm:$0xf]
        %v1191 = vld [vmem:[#allocation11 + $0x8] sm:$0xf]
        %v1192 = vld [vmem:[#allocation11 + $0xc] sm:$0xf]
        %v1193 = vld [vmem:[#allocation11 + $0x10] sm:$0xf]
        %v1194 = vld [vmem:[#allocation11 + $0x14] sm:$0xf]
        %v1195 = vld [vmem:[#allocation11 + $0x18] sm:$0xf]
        %v1196 = vld [vmem:[#allocation11 + $0x1c] sm:$0xf]
        %v1197 = vld [vmem:[#allocation11 + $0x20] sm:$0xf]
        %v1198 = vld [vmem:[#allocation11 + $0x24] sm:$0xf]
        %v1199 = vld [vmem:[#allocation11 + $0x28] sm:$0xf]
        %v1200 = vld [vmem:[#allocation11 + $0x2c] sm:$0xf]
        %v1201 = vld [vmem:[#allocation11 + $0x30] sm:$0xf]
        %v1202 = vld [vmem:[#allocation11 + $0x34] sm:$0xf]
        %v1203 = vld [vmem:[#allocation11 + $0x38] sm:$0xf]
        %v1204 = vld [vmem:[#allocation11 + $0x3c] sm:$0xf]
        %v1205 = vld [vmem:[#allocation11 + $0x40] sm:$0xf]
        %v1206 = vld [vmem:[#allocation11 + $0x44] sm:$0xf]
        %v1207 = vld [vmem:[#allocation11 + $0x48] sm:$0xf]
        %v1208 = vld [vmem:[#allocation11 + $0x4c] sm:$0xf]
        %v1209 = vld [vmem:[#allocation11 + $0x50] sm:$0xf]
        %v1210 = vld [vmem:[#allocation11 + $0x54] sm:$0xf]
        %v1211 = vld [vmem:[#allocation11 + $0x58] sm:$0xf]
        %v1212 = vld [vmem:[#allocation11 + $0x5c] sm:$0xf]
        %v1213 = vld [vmem:[#allocation11 + $0x60] sm:$0xf]
        %v1214 = vld [vmem:[#allocation11 + $0x64] sm:$0xf]
        %v1215 = vld [vmem:[#allocation11 + $0x68] sm:$0xf]
        %v1216 = vld [vmem:[#allocation11 + $0x6c] sm:$0xf]
        %v1217 = vld [vmem:[#allocation11 + $0x70] sm:$0xf]
        %v1218 = vld [vmem:[#allocation11 + $0x74] sm:$0xf]
        %v1219 = vld [vmem:[#allocation11 + $0x78] sm:$0xf]
        %v1220 = vld [vmem:[#allocation11 + $0x7c] sm:$0xf]
        %v1253 = vunpack.c.l.b16 %v1189
        %v1254 = vunpack.c.l.b16 %v1190
        %v1255 = vunpack.c.l.b16 %v1191
        %v1256 = vunpack.c.l.b16 %v1192
        %v1257 = vunpack.c.l.b16 %v1193
        %v1258 = vunpack.c.l.b16 %v1194
        %v1259 = vunpack.c.l.b16 %v1195
        %v1260 = vunpack.c.l.b16 %v1196
        %v1261 = vunpack.c.l.b16 %v1197
        %v1262 = vunpack.c.l.b16 %v1198
        %v1263 = vunpack.c.l.b16 %v1199
        %v1264 = vunpack.c.l.b16 %v1200
        %v1265 = vunpack.c.l.b16 %v1201
        %v1266 = vunpack.c.l.b16 %v1202
        %v1267 = vunpack.c.l.b16 %v1203
        %v1268 = vunpack.c.l.b16 %v1204
        %v1269 = vunpack.c.l.b16 %v1205
        %v1270 = vunpack.c.l.b16 %v1206
        %v1271 = vunpack.c.l.b16 %v1207
        %v1272 = vunpack.c.l.b16 %v1208
        %v1273 = vunpack.c.l.b16 %v1209
        %v1274 = vunpack.c.l.b16 %v1210
        %v1275 = vunpack.c.l.b16 %v1211
        %v1276 = vunpack.c.l.b16 %v1212
        %v1277 = vunpack.c.l.b16 %v1213
        %v1278 = vunpack.c.l.b16 %v1214
        %v1279 = vunpack.c.l.b16 %v1215
        %v1280 = vunpack.c.l.b16 %v1216
        %v1281 = vunpack.c.l.b16 %v1217
        %v1282 = vunpack.c.l.b16 %v1218
        %v1283 = vunpack.c.l.b16 %v1219
        %v1284 = vunpack.c.l.b16 %v1220
        %v1285 = vpack.c.b16 %v1254, %v1253
        %v1286 = vpack.c.b16 %v1256, %v1255
        %v1287 = vpack.c.b16 %v1258, %v1257
        %v1288 = vpack.c.b16 %v1260, %v1259
        %v1289 = vpack.c.b16 %v1262, %v1261
        %v1290 = vpack.c.b16 %v1264, %v1263
        %v1291 = vpack.c.b16 %v1266, %v1265
        %v1292 = vpack.c.b16 %v1268, %v1267
        %v1293 = vpack.c.b16 %v1270, %v1269
        %v1294 = vpack.c.b16 %v1272, %v1271
        %v1295 = vpack.c.b16 %v1274, %v1273
        %v1296 = vpack.c.b16 %v1276, %v1275
        %v1297 = vpack.c.b16 %v1278, %v1277
        %v1298 = vpack.c.b16 %v1280, %v1279
        %v1299 = vpack.c.b16 %v1282, %v1281
        %v1300 = vpack.c.b16 %v1284, %v1283
        %1317 = vmatprep.subr.bf16.mxu0 0
        %1318 = vmatpush1.bf16.msra.mxu0 %v1285
        %1319 = vmatprep.subr.bf16.mxu0 0
        %1320 = vmatpush1.bf16.msra.mxu0 %v1286
        %1321 = vmatprep.subr.bf16.mxu0 0
        %1322 = vmatpush1.bf16.msra.mxu0 %v1287
        %1323 = vmatprep.subr.bf16.mxu0 0
        %1324 = vmatpush1.bf16.msra.mxu0 %v1288
        %1325 = vmatprep.subr.bf16.mxu0 0
        %1326 = vmatpush1.bf16.msra.mxu0 %v1289
        %1327 = vmatprep.subr.bf16.mxu0 0
        %1328 = vmatpush1.bf16.msra.mxu0 %v1290
        %1329 = vmatprep.subr.bf16.mxu0 0
        %1330 = vmatpush1.bf16.msra.mxu0 %v1291
        %1331 = vmatprep.subr.bf16.mxu0 0
        %1332 = vmatpush1.bf16.msra.mxu0 %v1292
        %1333 = vmatprep.subr.bf16.mxu0 0
        %1334 = vmatpush1.bf16.msra.mxu0 %v1293
        %1335 = vmatprep.subr.bf16.mxu0 0
        %1336 = vmatpush1.bf16.msra.mxu0 %v1294
        %1337 = vmatprep.subr.bf16.mxu0 0
        %1338 = vmatpush1.bf16.msra.mxu0 %v1295
        %1339 = vmatprep.subr.bf16.mxu0 0
        %1340 = vmatpush1.bf16.msra.mxu0 %v1296
        %1341 = vmatprep.subr.bf16.mxu0 0
        %1342 = vmatpush1.bf16.msra.mxu0 %v1297
        %1343 = vmatprep.subr.bf16.mxu0 0
        %1344 = vmatpush1.bf16.msra.mxu0 %v1298
        %1345 = vmatprep.subr.bf16.mxu0 0
        %1346 = vmatpush1.bf16.msra.mxu0 %v1299
        %1347 = vmatprep.subr.bf16.mxu0 0
        %1348 = vmatpush1.bf16.msra.mxu0 %v1300
        %1349 = vmatprep.mubr.bf16.mxu0 %v1187
        %1350 = vmatmul.mubr.bf16.gmra.mrb[0].mxu0 %v1186
        %v1351 = vpop.f32.mrb[0].mxu0
        %v1352 = vadd.f32 0.0, %v1351
        %v1353 = vpop.f32.mrb[0].mxu0
        %v1354 = vpop.f32.mrb[0].mxu0
        %v1355 = vadd.f32 0.0, %v1354
        %v1356 = vpop.f32.mrb[0].mxu0
        %1357 = vdwg.mxu0
        %v1358 = vpack.c.bf16 %v1352, %v1352
        %v1359 = vpack.c.bf16 %v1355, %v1355
        %v1360 = vld [vmem:[%s7] sm:$0x3]
        %v1362 = vlaneseq
        %v1363 = vshrl.u32 %v1362, 7
        %v1364 = vsub.s32 0, %v1363
        %v1365 = vrot.slane %v1360, %v1364
        %v1366 = vlaneseq
        %v1367 = vshrl.u32 %v1366, 7
        %v1368 = vsub.s32 1, %v1367
        %v1369 = vrot.slane %v1360, %v1368
        %v1373 = vsel %vm707, %v1358, 0
        %v1376 = vsel %vm707, %v1359, 0
        %1378 = vmatprep.subr.bf16.mxu0 %v1376
        %1379 = vmatpush1.bf16.msra.mxu0 %v1373
        %1380 = vmatprep.subr.bf16.mxu0 0
        %1381 = vmatpush1.bf16.msra.mxu0 0
        %1382 = vmatprep.subr.bf16.mxu0 0
        %1383 = vmatpush1.bf16.msra.mxu0 0
        %1384 = vmatprep.subr.bf16.mxu0 0
        %1385 = vmatpush1.bf16.msra.mxu0 0
        %1386 = vmatprep.subr.bf16.mxu0 0
        %1387 = vmatpush1.bf16.msra.mxu0 0
        %1388 = vmatprep.subr.bf16.mxu0 0
        %1389 = vmatpush1.bf16.msra.mxu0 0
        %1390 = vmatprep.subr.bf16.mxu0 0
        %1391 = vmatpush1.bf16.msra.mxu0 0
        %1392 = vmatprep.subr.bf16.mxu0 0
        %1393 = vmatpush1.bf16.msra.mxu0 0
        %1394 = vmatprep.subr.bf16.mxu0 0
        %1395 = vmatpush1.bf16.msra.mxu0 0
        %1396 = vmatprep.subr.bf16.mxu0 0
        %1397 = vmatpush1.bf16.msra.mxu0 0
        %1398 = vmatprep.subr.bf16.mxu0 0
        %1399 = vmatpush1.bf16.msra.mxu0 0
        %1400 = vmatprep.subr.bf16.mxu0 0
        %1401 = vmatpush1.bf16.msra.mxu0 0
        %1402 = vmatprep.subr.bf16.mxu0 0
        %1403 = vmatpush1.bf16.msra.mxu0 0
        %1404 = vmatprep.subr.bf16.mxu0 0
        %1405 = vmatpush1.bf16.msra.mxu0 0
        %1406 = vmatprep.subr.bf16.mxu0 0
        %1407 = vmatpush1.bf16.msra.mxu0 0
        %1408 = vmatprep.subr.bf16.mxu0 0
        %1409 = vmatpush1.bf16.msra.mxu0 0
        %1410 = vmatprep.mubr.bf16.mxu0 0
        %1411 = vmatmul.mubr.bf16.gmra.mrb[0].mxu0 %v705
        %v1412 = vpop.f32.mrb[0].mxu0
        %v1413 = vadd.f32 %v1365, %v1412
        %v1414 = vpop.f32.mrb[0].mxu0
        %v1415 = vadd.f32 %v1369, %v1414
        %v1416 = vpop.f32.mrb[0].mxu0
        %v1417 = vpop.f32.mrb[0].mxu0
        %1418 = vdwg.mxu0
        %vm1419 = vcmp.gt.f32.partialorder %v1413, 0.0
        %vm1420 = vcmp.gt.f32.partialorder %v1415, 0.0
        %v1421 = vstv %s1188
        %v1422 = vmul.f32 %v1421, %v1413
        %v1423 = vmul.f32 %v1421, %v1415
        %v1424 = vsel %vm1419, %v1413, %v1422
        %v1425 = vsel %vm1420, %v1415, %v1423
        %v1426 = vrot.slane %v1424, 4
        %v1427 = vadd.f32 %v1424, %v1426
        %v1428 = vrot.slane %v1427, 2
        %v1429 = vadd.f32 %v1427, %v1428
        %v1430 = vrot.slane %v1429, 1
        %v1431 = vadd.f32 %v1429, %v1430
        %v1432 = vrcp.pop 8.0
        %v1433 = vmul.f32 %v1431, %v1432
        %v1434 = vxor.u32 %v1433, 2147483648
        %v1435 = vmul.f32 %v1434, 1.442695
        %v1436 = vpow.pop %v1435
        %v1437 = vadd.f32 %v1436, 1.0
        %v1438 = vrcp.pop %v1437
        %v1439 = vmul.f32 1.0, %v1438
        %v1440 = vld [vmem:[#allocation12] sm:$0xf]
        %v1441 = vld [vmem:[#allocation12 + $0x4] sm:$0xf]
        %v1442 = vld [vmem:[#allocation12 + $0x8] sm:$0xf]
        %v1443 = vld [vmem:[#allocation12 + $0xc] sm:$0xf]
        %v1444 = vld [vmem:[#allocation12 + $0x10] sm:$0xf]
        %v1445 = vld [vmem:[#allocation12 + $0x14] sm:$0xf]
        %v1446 = vld [vmem:[#allocation12 + $0x18] sm:$0xf]
        %v1447 = vld [vmem:[#allocation12 + $0x1c] sm:$0xf]
        %v1448 = vld [vmem:[#allocation12 + $0x20] sm:$0xf]
        %v1449 = vld [vmem:[#allocation12 + $0x24] sm:$0xf]
        %v1450 = vld [vmem:[#allocation12 + $0x28] sm:$0xf]
        %v1451 = vld [vmem:[#allocation12 + $0x2c] sm:$0xf]
        %v1452 = vld [vmem:[#allocation12 + $0x30] sm:$0xf]
        %v1453 = vld [vmem:[#allocation12 + $0x34] sm:$0xf]
        %v1454 = vld [vmem:[#allocation12 + $0x38] sm:$0xf]
        %v1455 = vld [vmem:[#allocation12 + $0x3c] sm:$0xf]
        %v1456 = vunpack.c.l.bf16 %v1440
        %v1457 = vunpack.c.l.bf16 %v1441
        %v1458 = vunpack.c.l.bf16 %v1442
        %v1459 = vunpack.c.l.bf16 %v1443
        %v1460 = vunpack.c.l.bf16 %v1444
        %v1461 = vunpack.c.l.bf16 %v1445
        %v1462 = vunpack.c.l.bf16 %v1446
        %v1463 = vunpack.c.l.bf16 %v1447
        %v1464 = vunpack.c.l.bf16 %v1448
        %v1465 = vunpack.c.l.bf16 %v1449
        %v1466 = vunpack.c.l.bf16 %v1450
        %v1467 = vunpack.c.l.bf16 %v1451
        %v1468 = vunpack.c.l.bf16 %v1452
        %v1469 = vunpack.c.l.bf16 %v1453
        %v1470 = vunpack.c.l.bf16 %v1454
        %v1471 = vunpack.c.l.bf16 %v1455
        %1472 = vmatprep.subr.mxu0 0.0
        %1473 = vmatpush1.xpose.msra.mxu0 %v1456
        %1474 = vmatprep.subr.mxu0 0.0
        %1475 = vmatpush1.xpose.msra.mxu0 %v1457
        %1476 = vmatprep.subr.mxu0 0.0
        %1477 = vmatpush1.xpose.msra.mxu0 %v1458
        %1478 = vmatprep.subr.mxu0 0.0
        %1479 = vmatpush1.xpose.msra.mxu0 %v1459
        %1480 = vmatprep.subr.mxu0 0.0
        %1481 = vmatpush1.xpose.msra.mxu0 %v1460
        %1482 = vmatprep.subr.mxu0 0.0
        %1483 = vmatpush1.xpose.msra.mxu0 %v1461
        %1484 = vmatprep.subr.mxu0 0.0
        %1485 = vmatpush1.xpose.msra.mxu0 %v1462
        %1486 = vmatprep.subr.mxu0 0.0
        %1487 = vmatpush1.xpose.msra.mxu0 %v1463
        %1488 = vmatprep.subr.mxu0 0.0
        %1489 = vmatpush1.xpose.msra.mxu0 %v1464
        %1490 = vmatprep.subr.mxu0 0.0
        %1491 = vmatpush1.xpose.msra.mxu0 %v1465
        %1492 = vmatprep.subr.mxu0 0.0
        %1493 = vmatpush1.xpose.msra.mxu0 %v1466
        %1494 = vmatprep.subr.mxu0 0.0
        %1495 = vmatpush1.xpose.msra.mxu0 %v1467
        %1496 = vmatprep.subr.mxu0 0.0
        %1497 = vmatpush1.xpose.msra.mxu0 %v1468
        %1498 = vmatprep.subr.mxu0 0.0
        %1499 = vmatpush1.xpose.msra.mxu0 %v1469
        %1500 = vmatprep.subr.mxu0 0.0
        %1501 = vmatpush1.xpose.msra.mxu0 %v1470
        %1502 = vmatprep.subr.mxu0 0.0
        %1503 = vmatpush1.xpose.msra.mxu0 %v1471
        %1504 = vmatprep.subr.mxu0 0.0
        %1505 = vmatpush1.xpose.msra.mxu0 0.0
        %1506 = vmatprep.subr.mxu0 0.0
        %1507 = vmatpush1.xpose.msra.mxu0 0.0
        %1508 = vmatprep.subr.mxu0 0.0
        %1509 = vmatpush1.xpose.msra.mxu0 0.0
        %1510 = vmatprep.subr.mxu0 0.0
        %1511 = vmatpush1.xpose.msra.mxu0 0.0
        %1512 = vmatprep.subr.mxu0 0.0
        %1513 = vmatpush1.xpose.msra.mxu0 0.0
        %1514 = vmatprep.subr.mxu0 0.0
        %1515 = vmatpush1.xpose.msra.mxu0 0.0
        %1516 = vmatprep.subr.mxu0 0.0
        %1517 = vmatpush1.xpose.msra.mxu0 0.0
        %1518 = vmatprep.subr.mxu0 0.0
        %1519 = vmatpush1.xpose.msra.mxu0 0.0
        %1520 = vmatprep.subr.mxu0 0.0
        %1521 = vmatpush1.xpose.msra.mxu0 0.0
        %1522 = vmatprep.subr.mxu0 0.0
        %1523 = vmatpush1.xpose.msra.mxu0 0.0
        %1524 = vmatprep.subr.mxu0 0.0
        %1525 = vmatpush1.xpose.msra.mxu0 0.0
        %1526 = vmatprep.subr.mxu0 0.0
        %1527 = vmatpush1.xpose.msra.mxu0 0.0
        %1528 = vmatprep.subr.mxu0 0.0
        %1529 = vmatpush1.xpose.msra.mxu0 0.0
        %1530 = vmatprep.subr.mxu0 0.0
        %1531 = vmatpush1.xpose.msra.mxu0 0.0
        %1532 = vmatprep.subr.mxu0 0.0
        %1533 = vmatpush1.xpose.msra.mxu0 0.0
        %1534 = vmatprep.subr.mxu0 0.0
        %1535 = vmatpush1.xpose.msra.mxu0 0.0
        %1536 = vmatprep.mubr.f32.mxu0 0.0
        %1537 = vmatmul.mubr.f32.gmra.mrb[0].mxu0 %v1439
        %v1538 = vpop.f32.mrb[0].mxu0
        %v1539 = vadd.f32 0.0, %v1538
        %v1540 = vpop.f32.mrb[0].mxu0
        %1541 = vdwg.mxu0
        %s1542 = sld [smem:[#allocation14 + $0x3]]
        %v1543 = vstv %s1542
        %1544 = vmatprep.subr.mxu0 0.0
        %1545 = vmatpush1.xpose.msra.mxu0 %v1424
        %1546 = vmatprep.subr.mxu0 0.0
        %1547 = vmatpush1.xpose.msra.mxu0 %v1425
        %1548 = vmatprep.subr.mxu0 0.0
        %1549 = vmatpush1.xpose.msra.mxu0 0.0
        %1550 = vmatprep.subr.mxu0 0.0
        %1551 = vmatpush1.xpose.msra.mxu0 0.0
        %1552 = vmatprep.subr.mxu0 0.0
        %1553 = vmatpush1.xpose.msra.mxu0 0.0
        %1554 = vmatprep.subr.mxu0 0.0
        %1555 = vmatpush1.xpose.msra.mxu0 0.0
        %1556 = vmatprep.subr.mxu0 0.0
        %1557 = vmatpush1.xpose.msra.mxu0 0.0
        %1558 = vmatprep.subr.mxu0 0.0
        %1559 = vmatpush1.xpose.msra.mxu0 0.0
        %1560 = vmatprep.subr.mxu0 0.0
        %1561 = vmatpush1.xpose.msra.mxu0 0.0
        %1562 = vmatprep.subr.mxu0 0.0
        %1563 = vmatpush1.xpose.msra.mxu0 0.0
        %1564 = vmatprep.subr.mxu0 0.0
        %1565 = vmatpush1.xpose.msra.mxu0 0.0
        %1566 = vmatprep.subr.mxu0 0.0
        %1567 = vmatpush1.xpose.msra.mxu0 0.0
        %1568 = vmatprep.subr.mxu0 0.0
        %1569 = vmatpush1.xpose.msra.mxu0 0.0
        %1570 = vmatprep.subr.mxu0 0.0
        %1571 = vmatpush1.xpose.msra.mxu0 0.0
        %1572 = vmatprep.subr.mxu0 0.0
        %1573 = vmatpush1.xpose.msra.mxu0 0.0
        %1574 = vmatprep.subr.mxu0 0.0
        %1575 = vmatpush1.xpose.msra.mxu0 0.0
        %1576 = vmatprep.subr.mxu0 0.0
        %1577 = vmatpush1.xpose.msra.mxu0 0.0
        %1578 = vmatprep.subr.mxu0 0.0
        %1579 = vmatpush1.xpose.msra.mxu0 0.0
        %1580 = vmatprep.subr.mxu0 0.0
        %1581 = vmatpush1.xpose.msra.mxu0 0.0
        %1582 = vmatprep.subr.mxu0 0.0
        %1583 = vmatpush1.xpose.msra.mxu0 0.0
        %1584 = vmatprep.subr.mxu0 0.0
        %1585 = vmatpush1.xpose.msra.mxu0 0.0
        %1586 = vmatprep.subr.mxu0 0.0
        %1587 = vmatpush1.xpose.msra.mxu0 0.0
        %1588 = vmatprep.subr.mxu0 0.0
        %1589 = vmatpush1.xpose.msra.mxu0 0.0
        %1590 = vmatprep.subr.mxu0 0.0
        %1591 = vmatpush1.xpose.msra.mxu0 0.0
        %1592 = vmatprep.subr.mxu0 0.0
        %1593 = vmatpush1.xpose.msra.mxu0 0.0
        %1594 = vmatprep.subr.mxu0 0.0
        %1595 = vmatpush1.xpose.msra.mxu0 0.0
        %1596 = vmatprep.subr.mxu0 0.0
        %1597 = vmatpush1.xpose.msra.mxu0 0.0
        %1598 = vmatprep.subr.mxu0 0.0
        %1599 = vmatpush1.xpose.msra.mxu0 0.0
        %1600 = vmatprep.subr.mxu0 0.0
        %1601 = vmatpush1.xpose.msra.mxu0 0.0
        %1602 = vmatprep.subr.mxu0 0.0
        %1603 = vmatpush1.xpose.msra.mxu0 0.0
        %1604 = vmatprep.subr.mxu0 0.0
        %1605 = vmatpush1.xpose.msra.mxu0 0.0
        %1606 = vmatprep.subr.mxu0 0.0
        %1607 = vmatpush1.xpose.msra.mxu0 0.0
        %1608 = vmatprep.mubr.f32.mxu0 0.0
        %1609 = vmatmul.mubr.f32.gmra.mrb[0].mxu0 %v1539
        %v1610 = vpop.f32.mrb[0].mxu0
        %v1611 = vadd.f32 %v1543, %v1610
        %v1612 = vpop.f32.mrb[0].mxu0
        %1613 = vdwg.mxu0
        %v1614 = vld [vmem:[%s526] sm:$0x1]
        %v1615 = vadd.f32 %v1611, %v1614
        %vm1616 = vcmask 122880
        %1617 = vst.msk [vmem:[%s523] sm:$0x1] %vm1616, %v1615
        %s1618 = sand.u32 %s288, 1
        %s1619 = scalar_lea.sflag [#allocation4], %s1618
        %s1620 = sand.u32 %s288, 1
        %s1621 = scalar_lea.vmem [#allocation15], %s1620
        // Predicated region
        $region93: #{tpu_custom_call.1} parent=63 // pred_check
          %p1622 = pneg %p298
        $region94: #{tpu_custom_call.1} parent=63 // pred_check_branch
          %1624 = sbr.rel (%p1622) target = $region96
        $region95: #{tpu_custom_call.1} parent=63 // pred_region
          %s1626 = ssub.s32 16, 16
          %1627 = vsyncadd %s1619, %s1626
          %s1628 = smul.addr %s34, 16
          %s1629 = scalar_lea.hbm %s11, %s1628
          %s1631 = sshll.u32 %s1621, 4
          %s1632 = int_to_ptr.vmem [resolvable:$true] %s1631
          %1634 = dma.vmem_to_hbm [thread:$0]  %s1632, 16, %s1629, %s1619
        $region96: #{tpu_custom_call.1} parent=63 // pred_fallthru
          _
      $region64: #{tpu_custom_call.1} parent=5 // pred_fallthru
        _
      %p1635 = scmp.le.s32.totalorder 2, %s29
      // Predicated region
      $region97: #{tpu_custom_call.1} parent=5 // pred_check
        %p1636 = pneg %p1635
      $region98: #{tpu_custom_call.1} parent=5 // pred_check_branch
        %1638 = sbr.rel (%p1636) target = $region100
      $region99: #{tpu_custom_call.1} parent=5 // pred_region
        %s1639 = ssub.s32 %s29, 2
        // Predicated region
        $region101: #{tpu_custom_call.1} parent=99 // pred_check
          %p1640 = pneg %p304
        $region102: #{tpu_custom_call.1} parent=99 // pred_check_branch
          %1642 = sbr.rel (%p1640) target = $region104
        $region103: #{tpu_custom_call.1} parent=99 // pred_region
          %s1643 = sand.u32 %s289, 1
          %s1644 = scalar_lea.sflag [#allocation4], %s1643
          %s1645 = sand.u32 %s289, 1
          %s1646 = scalar_lea.vmem [#allocation15], %s1645
          %1647 = dma.done %s1644, 16
        $region104: #{tpu_custom_call.1} parent=99 // pred_fallthru
          _
      $region100: #{tpu_custom_call.1} parent=5 // pred_fallthru
        _
    $region6: #{tpu_custom_call.1} parent=1 // loop_footer
      %s33 = sadd.s32 1, %s29
    $region7: #{tpu_custom_call.1} parent=1 // loop_footer_branch
      %28 = sbr.rel target = $region3
    $region8: #{tpu_custom_call.1} parent=1 // loop_exit
      _
    %1648 = vsyncpa [#allocation3], 1
    %s1649 = scalar_lea.sflag [#allocation3], 1
    %1650 = vsyncpa %s1649, 1
    %1651 = vsyncpa [#allocation7], 1
    %s1652 = scalar_lea.sflag [#allocation7], 1
    %1653 = vsyncpa %s1652, 1
    %1654 = vsyncpa [#allocation10], 1
    %1655 = vsyncpa [#allocation13], 1
    %1656 = vsyncpa [#allocation4], 1
    %s1657 = scalar_lea.sflag [#allocation4], 1
    %1658 = vsyncpa %s1657, 1
    %1659 = vsyncpa [#allocation5], 1
    %s1660 = scalar_lea.sflag [#allocation5], 1
    %1661 = vsyncpa %s1660, 1

</llo_original>
